<compile_context>
chip_gen: v6e
topology: v6e:2x2x1
jax: 0.10.0
libtpu: 0.0.40
codegen_flags: <defaults>
</compile_context>

<pallas_src>
import functools

import jax
import jax.numpy as jnp
from jax.experimental import pallas as pl
from jax.experimental.pallas import tpu as pltpu


def adaatt_kernel(h_ref, fr_ref, cf_ref, cfe_ref,
                  w_fr_ref, b_fr_ref, w_fre_ref, b_fre_ref,
                  w_ho_ref, b_ho_ref, w_hoe_ref, b_hoe_ref,
                  w_cfe_ref, b_cfe_ref, w_a_ref, b_a_ref,
                  out_ref, *, att, att_hid, r):
    f32 = jnp.float32
    bf16 = jnp.bfloat16

    h = h_ref[...]          # (TB, R) f32
    fr_in = fr_ref[...]     # (TB, R) f32
    w_a = w_a_ref[...]      # (1, R)  f32
    b_a = b_a_ref[...]      # (1, 1)  f32

    # fr_linear: Linear(R->E) + ReLU  (Dropout == identity in eval mode)
    fake_region = jnp.maximum(
        jnp.dot(fr_in.astype(bf16), w_fr_ref[...],
                preferred_element_type=f32) + b_fr_ref[...], 0.0)           # (TB, E)
    # fr_embed: Linear(E->E)
    fake_region_embed = (jnp.dot(fake_region.astype(bf16), w_fre_ref[...],
                                 preferred_element_type=f32) + b_fre_ref[...])

    # ho_linear: Linear(R->E) + Tanh   (Dropout == identity)
    h_out_linear = jnp.tanh(
        jnp.dot(h.astype(bf16), w_ho_ref[...],
                preferred_element_type=f32) + b_ho_ref[...])
    # ho_embed: Linear(E->E)
    h_out_embed = (jnp.dot(h_out_linear.astype(bf16), w_hoe_ref[...],
                           preferred_element_type=f32) + b_hoe_ref[...])    # (TB, E)

    # --- attention slot 0: the fake region (prepended slot in torch.cat) ---
    hA_fake = jnp.tanh(fake_region_embed + h_out_embed)                     # (TB, R)
    logit_fake = jnp.sum(hA_fake * w_a, axis=-1, keepdims=True) + b_a       # (TB, 1)

    # --- conv-region slots: one (TB,512)@(512,R) matmul per slot ---
    w_cfe = w_cfe_ref[...]   # (512, R) bf16
    b_cfe = b_cfe_ref[...]   # (1, R)   f32

    logits = []
    for a in range(att):
        x = cfe_ref[:, a * att_hid:(a + 1) * att_hid]                       # (TB, 512) bf16
        ce = jnp.dot(x, w_cfe, preferred_element_type=f32) + b_cfe          # (TB, R)
        hA = jnp.tanh(ce + h_out_embed)
        logits.append(jnp.sum(hA * w_a, axis=-1, keepdims=True) + b_a)      # (TB, 1)

    # --- softmax over the ATT+1 slots, without building img_all / concat ---
    m = logit_fake
    for l in logits:
        m = jnp.maximum(m, l)
    e_fake = jnp.exp(logit_fake - m)                                        # (TB, 1)
    es = [jnp.exp(l - m) for l in logits]
    denom = e_fake
    for e in es:
        denom = denom + e
    inv = pl.reciprocal(denom, approx=True)                                 # (TB, 1)

    # visAtt = PI @ img_all  (weighted sum over slots), slot 0 = fake_region
    vis_att = (e_fake * inv) * fake_region                                  # (TB, R)
    for a in range(att):
        cf_a = cf_ref[:, a * r:(a + 1) * r]                                 # (TB, R)
        vis_att = vis_att + (es[a] * inv) * cf_a

    # beta_t = PI[:, -1:]  (last conv-region slot, as in the reference code,
    # since fake_region is prepended at index 0)
    beta = es[att - 1] * inv                                                # (TB, 1)
    c_t_hat = beta * fake_region + (1.0 - beta) * vis_att                   # (TB, R)
    out_ref[...] = c_t_hat.astype(out_ref.dtype)


def adaatt_attention(h_out, fake_region, conv_feat, conv_feat_embed, params,
                     *, block_b=256):
    B, R = h_out.shape
    att = conv_feat.shape[1]
    att_hid = conv_feat_embed.shape[2]

    # Flatten the region axis into lanes so per-slot slices in the kernel are
    # 128-aligned lane slices (no in-kernel reshapes / relayouts).
    cf2 = conv_feat.reshape(B, att * R)
    cfe2 = conv_feat_embed.reshape(B, att * att_hid).astype(jnp.bfloat16)

    # Cast matmul weights to bf16 once; keep biases and the alpha_net vector
    # (used in f32 VPU mul + lane reduce) in f32.
    (w_fr, b_fr, w_fre, b_fre, w_ho, b_ho, w_hoe, b_hoe,
     w_cfe, b_cfe, w_a, b_a) = params
    bf = lambda w: w.astype(jnp.bfloat16)
    kparams = [bf(w_fr), b_fr, bf(w_fre), b_fre, bf(w_ho), b_ho, bf(w_hoe), b_hoe,
               bf(w_cfe), b_cfe, w_a, b_a]

    tb = min(block_b, B)
    grid = (pl.cdiv(B, tb),)

    def batch_spec(cols):
        return pl.BlockSpec((tb, cols), lambda i: (i, 0))

    def full_spec(shape):
        return pl.BlockSpec(shape, lambda i: (0, 0))

    in_specs = [
        batch_spec(R),                 # h_out
        batch_spec(R),                 # fake_region
        batch_spec(att * R),           # conv_feat (flattened)
        batch_spec(att * att_hid),     # conv_feat_embed (flattened, bf16)
    ] + [full_spec(p.shape) for p in kparams]

    kernel = functools.partial(adaatt_kernel, att=att, att_hid=att_hid, r=R)

    out = pl.pallas_call(
        kernel,
        out_shape=jax.ShapeDtypeStruct((B, R), jnp.float32),
        grid=grid,
        in_specs=in_specs,
        out_specs=batch_spec(R),
        compiler_params=pltpu.CompilerParams(
            dimension_semantics=("parallel",),
            vmem_limit_bytes=48 * 1024 * 1024,   # headroom under v7x's 64 MiB
        ),
    )(h_out, fake_region, cf2, cfe2, *kparams)
    return out


def adaatt_reference(h_out, fake_region_in, conv_feat, conv_feat_embed_in, params):
    (w_fr, b_fr, w_fre, b_fre, w_ho, b_ho, w_hoe, b_hoe,
     w_cfe, b_cfe, w_a, b_a) = params
    fr = jax.nn.relu(fake_region_in @ w_fr + b_fr)
    fr_embed = fr @ w_fre + b_fre
    ho = jnp.tanh(h_out @ w_ho + b_ho)
    ho_embed = ho @ w_hoe + b_hoe
    cfe = conv_feat_embed_in @ w_cfe + b_cfe
    img_all = jnp.concatenate([fr[:, None, :], conv_feat], axis=1)
    img_all_embed = jnp.concatenate([fr_embed[:, None, :], cfe], axis=1)
    hA = jnp.tanh(img_all_embed + ho_embed[:, None, :])
    logits = jnp.einsum('bar,r->ba', hA, w_a[0]) + b_a[0, 0]
    pi = jax.nn.softmax(logits, axis=1)
    vis_att = jnp.einsum('ba,bar->br', pi, img_all)
    beta = pi[:, -1:]
    return beta * fr + (1.0 - beta) * vis_att


def make_params(key, R, E, att_hid):
    ks = jax.random.split(key, 12)
    n = lambda k, s: (0.02 * jax.random.normal(k, s)).astype(jnp.float32)
    return [
        n(ks[0], (R, E)),        n(ks[1], (1, E)),      # fr_linear
        n(ks[2], (E, E)),        n(ks[3], (1, E)),      # fr_embed
        n(ks[4], (R, E)),        n(ks[5], (1, E)),      # ho_linear
        n(ks[6], (E, E)),        n(ks[7], (1, E)),      # ho_embed
        n(ks[8], (att_hid, R)),  n(ks[9], (1, R)),      # conv_feat_embed
        n(ks[10], (1, R)),       n(ks[11], (1, 1)),     # alpha_net
    ]
    # TODO(synk): att2h is defined in __init__ but never used in forward; omitted.


def _run_case(key, B, ATT, R, ATT_HID, params, block_b):
    k0, k1, k2, k3 = jax.random.split(key, 4)
    h_out = jax.random.normal(k0, (B, R), dtype=jnp.float32)
    fake_region = jax.random.normal(k1, (B, R), dtype=jnp.float32)
    conv_feat = jax.random.normal(k2, (B, ATT, R), dtype=jnp.float32)
    conv_feat_embed = jax.random.normal(k3, (B, ATT, ATT_HID), dtype=jnp.float32)

    out = adaatt_attention(h_out, fake_region, conv_feat, conv_feat_embed,
                           params, block_b=block_b)
    out = jax.block_until_ready(out)

    ref = adaatt_reference(h_out, fake_region, conv_feat, conv_feat_embed, params)
    ref = jax.block_until_ready(ref)

    assert out.shape == (B, R)
    assert jnp.allclose(out, ref, rtol=1e-2, atol=1e-2), \
        f"B={B}: max abs diff {jnp.max(jnp.abs(out - ref))}"


if __name__ == "__main__":
    ATT = 7
    R = E = 128            # rnn_size == input_encoding_size (required by the forward)
    ATT_HID = 512          # att_hid_size must be 512 (hard-coded Linear(512, rnn_size))

    key = jax.random.PRNGKey(0)
    kdata_small, kdata_big, kp = jax.random.split(key, 3)
    params = make_params(kp, R, E, ATT_HID)

    # Small sanity case (single block).
    _run_case(kdata_small, B=2, ATT=ATT, R=R, ATT_HID=ATT_HID,
              params=params, block_b=256)
    # Batched case exercising multiple grid steps (grid = 96 / 32 = 3).
    _run_case(kdata_big, B=96, ATT=ATT, R=R, ATT_HID=ATT_HID,
              params=params, block_b=32)

    print("KERNEL_OK")
</pallas_src>

<mosaic_0001>
module attributes {stable_mosaic.version = 11 : i64} {
  func.func @adaatt_kernel(%arg0: i32, %arg1: memref<2x128xf32, #tpu.memory_space<vmem>>, %arg2: memref<2x128xf32, #tpu.memory_space<vmem>>, %arg3: memref<2x896xf32, #tpu.memory_space<vmem>>, %arg4: memref<2x3584xbf16, #tpu.memory_space<vmem>>, %arg5: memref<128x128xbf16, #tpu.memory_space<vmem>>, %arg6: memref<1x128xf32, #tpu.memory_space<vmem>>, %arg7: memref<128x128xbf16, #tpu.memory_space<vmem>>, %arg8: memref<1x128xf32, #tpu.memory_space<vmem>>, %arg9: memref<128x128xbf16, #tpu.memory_space<vmem>>, %arg10: memref<1x128xf32, #tpu.memory_space<vmem>>, %arg11: memref<128x128xbf16, #tpu.memory_space<vmem>>, %arg12: memref<1x128xf32, #tpu.memory_space<vmem>>, %arg13: memref<512x128xbf16, #tpu.memory_space<vmem>>, %arg14: memref<1x128xf32, #tpu.memory_space<vmem>>, %arg15: memref<1x128xf32, #tpu.memory_space<vmem>>, %arg16: memref<1x1xf32, #tpu.memory_space<vmem>>, %arg17: memref<2x128xf32, #tpu.memory_space<vmem>>) attributes {dimension_semantics = [#tpu.dimension_semantics<parallel>], iteration_bounds = array<i64: 1>, scalar_prefetch = 0 : i64, scratch_operands = 0 : i64, tpu.core_type = #tpu.core_type<tc>, window_params = [{transform_indices = @transform_0, window_bounds = array<i64: 2, 128>}, {transform_indices = @transform_1, window_bounds = array<i64: 2, 128>}, {transform_indices = @transform_2, window_bounds = array<i64: 2, 896>}, {transform_indices = @transform_3, window_bounds = array<i64: 2, 3584>}, {pipeline_mode = #tpu.pipeline_mode<synchronous>, transform_indices = @transform_4, window_bounds = array<i64: 128, 128>}, {pipeline_mode = #tpu.pipeline_mode<synchronous>, transform_indices = @transform_5, window_bounds = array<i64: 1, 128>}, {pipeline_mode = #tpu.pipeline_mode<synchronous>, transform_indices = @transform_6, window_bounds = array<i64: 128, 128>}, {pipeline_mode = #tpu.pipeline_mode<synchronous>, transform_indices = @transform_7, window_bounds = array<i64: 1, 128>}, {pipeline_mode = #tpu.pipeline_mode<synchronous>, transform_indices = @transform_8, window_bounds = array<i64: 128, 128>}, {pipeline_mode = #tpu.pipeline_mode<synchronous>, transform_indices = @transform_9, window_bounds = array<i64: 1, 128>}, {pipeline_mode = #tpu.pipeline_mode<synchronous>, transform_indices = @transform_10, window_bounds = array<i64: 128, 128>}, {pipeline_mode = #tpu.pipeline_mode<synchronous>, transform_indices = @transform_11, window_bounds = array<i64: 1, 128>}, {pipeline_mode = #tpu.pipeline_mode<synchronous>, transform_indices = @transform_12, window_bounds = array<i64: 512, 128>}, {pipeline_mode = #tpu.pipeline_mode<synchronous>, transform_indices = @transform_13, window_bounds = array<i64: 1, 128>}, {pipeline_mode = #tpu.pipeline_mode<synchronous>, transform_indices = @transform_14, window_bounds = array<i64: 1, 128>}, {pipeline_mode = #tpu.pipeline_mode<synchronous>, transform_indices = @transform_15, window_bounds = array<i64: 1, 1>}, {transform_indices = @transform_16, window_bounds = array<i64: 2, 128>}]} {
    %c0 = arith.constant 0 : index
    %c0_0 = arith.constant 0 : index
    %0 = vector.load %arg1[%c0, %c0_0] : memref<2x128xf32, #tpu.memory_space<vmem>>, vector<2x128xf32>
    %c0_1 = arith.constant 0 : index
    %c0_2 = arith.constant 0 : index
    %1 = vector.load %arg2[%c0_1, %c0_2] : memref<2x128xf32, #tpu.memory_space<vmem>>, vector<2x128xf32>
    %c0_3 = arith.constant 0 : index
    %c0_4 = arith.constant 0 : index
    %2 = vector.load %arg15[%c0_3, %c0_4] : memref<1x128xf32, #tpu.memory_space<vmem>>, vector<1x128xf32>
    %c0_5 = arith.constant 0 : index
    %c0_6 = arith.constant 0 : index
    %3 = vector.load %arg16[%c0_5, %c0_6] : memref<1x1xf32, #tpu.memory_space<vmem>>, vector<1x1xf32>
    %4 = arith.truncf %1 : vector<2x128xf32> to vector<2x128xbf16>
    %c0_7 = arith.constant 0 : index
    %c0_8 = arith.constant 0 : index
    %5 = vector.load %arg5[%c0_7, %c0_8] : memref<128x128xbf16, #tpu.memory_space<vmem>>, vector<128x128xbf16>
    %cst = arith.constant dense<0.000000e+00> : vector<2x128xf32>
    %6 = tpu.matmul %4, %5, %cst {dimension_numbers = #tpu.dot_dimension_numbers<[1], [0], [0], [1], [0, 0, 1, 1], [], []>} : vector<2x128xbf16>, vector<128x128xbf16>, vector<2x128xf32> -> vector<2x128xf32>
    %c0_9 = arith.constant 0 : index
    %c0_10 = arith.constant 0 : index
    %7 = vector.load %arg6[%c0_9, %c0_10] : memref<1x128xf32, #tpu.memory_space<vmem>>, vector<1x128xf32>
    %8 = vector.broadcast %7 : vector<1x128xf32> to vector<2x128xf32>
    %9 = arith.addf %6, %8 : vector<2x128xf32>
    %cst_11 = arith.constant 0.000000e+00 : f32
    %10 = vector.broadcast %cst_11 : f32 to vector<2x128xf32>
    %11 = arith.maximumf %9, %10 : vector<2x128xf32>
    %12 = arith.truncf %11 : vector<2x128xf32> to vector<2x128xbf16>
    %c0_12 = arith.constant 0 : index
    %c0_13 = arith.constant 0 : index
    %13 = vector.load %arg7[%c0_12, %c0_13] : memref<128x128xbf16, #tpu.memory_space<vmem>>, vector<128x128xbf16>
    %cst_14 = arith.constant dense<0.000000e+00> : vector<2x128xf32>
    %14 = tpu.matmul %12, %13, %cst_14 {dimension_numbers = #tpu.dot_dimension_numbers<[1], [0], [0], [1], [0, 0, 1, 1], [], []>} : vector<2x128xbf16>, vector<128x128xbf16>, vector<2x128xf32> -> vector<2x128xf32>
    %c0_15 = arith.constant 0 : index
    %c0_16 = arith.constant 0 : index
    %15 = vector.load %arg8[%c0_15, %c0_16] : memref<1x128xf32, #tpu.memory_space<vmem>>, vector<1x128xf32>
    %16 = vector.broadcast %15 : vector<1x128xf32> to vector<2x128xf32>
    %17 = arith.addf %14, %16 : vector<2x128xf32>
    %18 = arith.truncf %0 : vector<2x128xf32> to vector<2x128xbf16>
    %c0_17 = arith.constant 0 : index
    %c0_18 = arith.constant 0 : index
    %19 = vector.load %arg9[%c0_17, %c0_18] : memref<128x128xbf16, #tpu.memory_space<vmem>>, vector<128x128xbf16>
    %cst_19 = arith.constant dense<0.000000e+00> : vector<2x128xf32>
    %20 = tpu.matmul %18, %19, %cst_19 {dimension_numbers = #tpu.dot_dimension_numbers<[1], [0], [0], [1], [0, 0, 1, 1], [], []>} : vector<2x128xbf16>, vector<128x128xbf16>, vector<2x128xf32> -> vector<2x128xf32>
    %c0_20 = arith.constant 0 : index
    %c0_21 = arith.constant 0 : index
    %21 = vector.load %arg10[%c0_20, %c0_21] : memref<1x128xf32, #tpu.memory_space<vmem>>, vector<1x128xf32>
    %22 = vector.broadcast %21 : vector<1x128xf32> to vector<2x128xf32>
    %23 = arith.addf %20, %22 : vector<2x128xf32>
    %24 = math.tanh %23 : vector<2x128xf32>
    %25 = arith.truncf %24 : vector<2x128xf32> to vector<2x128xbf16>
    %c0_22 = arith.constant 0 : index
    %c0_23 = arith.constant 0 : index
    %26 = vector.load %arg11[%c0_22, %c0_23] : memref<128x128xbf16, #tpu.memory_space<vmem>>, vector<128x128xbf16>
    %cst_24 = arith.constant dense<0.000000e+00> : vector<2x128xf32>
    %27 = tpu.matmul %25, %26, %cst_24 {dimension_numbers = #tpu.dot_dimension_numbers<[1], [0], [0], [1], [0, 0, 1, 1], [], []>} : vector<2x128xbf16>, vector<128x128xbf16>, vector<2x128xf32> -> vector<2x128xf32>
    %c0_25 = arith.constant 0 : index
    %c0_26 = arith.constant 0 : index
    %28 = vector.load %arg12[%c0_25, %c0_26] : memref<1x128xf32, #tpu.memory_space<vmem>>, vector<1x128xf32>
    %29 = vector.broadcast %28 : vector<1x128xf32> to vector<2x128xf32>
    %30 = arith.addf %27, %29 : vector<2x128xf32>
    %31 = arith.addf %17, %30 : vector<2x128xf32>
    %32 = math.tanh %31 : vector<2x128xf32>
    %33 = vector.broadcast %2 : vector<1x128xf32> to vector<2x128xf32>
    %34 = arith.mulf %32, %33 : vector<2x128xf32>
    %cst_27 = arith.constant dense<0.000000e+00> : vector<2xf32>
    %35 = vector.multi_reduction <add>, %34, %cst_27 [1] : vector<2x128xf32> to vector<2xf32>
    %36 = vector.shape_cast %35 : vector<2xf32> to vector<2x1xf32>
    %37 = vector.broadcast %3 : vector<1x1xf32> to vector<2x1xf32>
    %38 = arith.addf %36, %37 : vector<2x1xf32>
    %c0_28 = arith.constant 0 : index
    %c0_29 = arith.constant 0 : index
    %39 = vector.load %arg13[%c0_28, %c0_29] : memref<512x128xbf16, #tpu.memory_space<vmem>>, vector<512x128xbf16>
    %c0_30 = arith.constant 0 : index
    %c0_31 = arith.constant 0 : index
    %40 = vector.load %arg14[%c0_30, %c0_31] : memref<1x128xf32, #tpu.memory_space<vmem>>, vector<1x128xf32>
    %c0_32 = arith.constant 0 : index
    %c0_33 = arith.constant 0 : index
    %41 = vector.load %arg4[%c0_32, %c0_33] : memref<2x3584xbf16, #tpu.memory_space<vmem>>, vector<2x512xbf16>
    %cst_34 = arith.constant dense<0.000000e+00> : vector<2x128xf32>
    %42 = tpu.matmul %41, %39, %cst_34 {dimension_numbers = #tpu.dot_dimension_numbers<[1], [0], [0], [1], [0, 0, 1, 1], [], []>} : vector<2x512xbf16>, vector<512x128xbf16>, vector<2x128xf32> -> vector<2x128xf32>
    %43 = vector.broadcast %40 : vector<1x128xf32> to vector<2x128xf32>
    %44 = arith.addf %42, %43 : vector<2x128xf32>
    %45 = arith.addf %44, %30 : vector<2x128xf32>
    %46 = math.tanh %45 : vector<2x128xf32>
    %47 = vector.broadcast %2 : vector<1x128xf32> to vector<2x128xf32>
    %48 = arith.mulf %46, %47 : vector<2x128xf32>
    %cst_35 = arith.constant dense<0.000000e+00> : vector<2xf32>
    %49 = vector.multi_reduction <add>, %48, %cst_35 [1] : vector<2x128xf32> to vector<2xf32>
    %50 = vector.shape_cast %49 : vector<2xf32> to vector<2x1xf32>
    %51 = vector.broadcast %3 : vector<1x1xf32> to vector<2x1xf32>
    %52 = arith.addf %50, %51 : vector<2x1xf32>
    %c0_36 = arith.constant 0 : index
    %c512 = arith.constant 512 : index
    %53 = vector.load %arg4[%c0_36, %c512] : memref<2x3584xbf16, #tpu.memory_space<vmem>>, vector<2x512xbf16>
    %cst_37 = arith.constant dense<0.000000e+00> : vector<2x128xf32>
    %54 = tpu.matmul %53, %39, %cst_37 {dimension_numbers = #tpu.dot_dimension_numbers<[1], [0], [0], [1], [0, 0, 1, 1], [], []>} : vector<2x512xbf16>, vector<512x128xbf16>, vector<2x128xf32> -> vector<2x128xf32>
    %55 = vector.broadcast %40 : vector<1x128xf32> to vector<2x128xf32>
    %56 = arith.addf %54, %55 : vector<2x128xf32>
    %57 = arith.addf %56, %30 : vector<2x128xf32>
    %58 = math.tanh %57 : vector<2x128xf32>
    %59 = vector.broadcast %2 : vector<1x128xf32> to vector<2x128xf32>
    %60 = arith.mulf %58, %59 : vector<2x128xf32>
    %cst_38 = arith.constant dense<0.000000e+00> : vector<2xf32>
    %61 = vector.multi_reduction <add>, %60, %cst_38 [1] : vector<2x128xf32> to vector<2xf32>
    %62 = vector.shape_cast %61 : vector<2xf32> to vector<2x1xf32>
    %63 = vector.broadcast %3 : vector<1x1xf32> to vector<2x1xf32>
    %64 = arith.addf %62, %63 : vector<2x1xf32>
    %c0_39 = arith.constant 0 : index
    %c1024 = arith.constant 1024 : index
    %65 = vector.load %arg4[%c0_39, %c1024] : memref<2x3584xbf16, #tpu.memory_space<vmem>>, vector<2x512xbf16>
    %cst_40 = arith.constant dense<0.000000e+00> : vector<2x128xf32>
    %66 = tpu.matmul %65, %39, %cst_40 {dimension_numbers = #tpu.dot_dimension_numbers<[1], [0], [0], [1], [0, 0, 1, 1], [], []>} : vector<2x512xbf16>, vector<512x128xbf16>, vector<2x128xf32> -> vector<2x128xf32>
    %67 = vector.broadcast %40 : vector<1x128xf32> to vector<2x128xf32>
    %68 = arith.addf %66, %67 : vector<2x128xf32>
    %69 = arith.addf %68, %30 : vector<2x128xf32>
    %70 = math.tanh %69 : vector<2x128xf32>
    %71 = vector.broadcast %2 : vector<1x128xf32> to vector<2x128xf32>
    %72 = arith.mulf %70, %71 : vector<2x128xf32>
    %cst_41 = arith.constant dense<0.000000e+00> : vector<2xf32>
    %73 = vector.multi_reduction <add>, %72, %cst_41 [1] : vector<2x128xf32> to vector<2xf32>
    %74 = vector.shape_cast %73 : vector<2xf32> to vector<2x1xf32>
    %75 = vector.broadcast %3 : vector<1x1xf32> to vector<2x1xf32>
    %76 = arith.addf %74, %75 : vector<2x1xf32>
    %c0_42 = arith.constant 0 : index
    %c1536 = arith.constant 1536 : index
    %77 = vector.load %arg4[%c0_42, %c1536] : memref<2x3584xbf16, #tpu.memory_space<vmem>>, vector<2x512xbf16>
    %cst_43 = arith.constant dense<0.000000e+00> : vector<2x128xf32>
    %78 = tpu.matmul %77, %39, %cst_43 {dimension_numbers = #tpu.dot_dimension_numbers<[1], [0], [0], [1], [0, 0, 1, 1], [], []>} : vector<2x512xbf16>, vector<512x128xbf16>, vector<2x128xf32> -> vector<2x128xf32>
    %79 = vector.broadcast %40 : vector<1x128xf32> to vector<2x128xf32>
    %80 = arith.addf %78, %79 : vector<2x128xf32>
    %81 = arith.addf %80, %30 : vector<2x128xf32>
    %82 = math.tanh %81 : vector<2x128xf32>
    %83 = vector.broadcast %2 : vector<1x128xf32> to vector<2x128xf32>
    %84 = arith.mulf %82, %83 : vector<2x128xf32>
    %cst_44 = arith.constant dense<0.000000e+00> : vector<2xf32>
    %85 = vector.multi_reduction <add>, %84, %cst_44 [1] : vector<2x128xf32> to vector<2xf32>
    %86 = vector.shape_cast %85 : vector<2xf32> to vector<2x1xf32>
    %87 = vector.broadcast %3 : vector<1x1xf32> to vector<2x1xf32>
    %88 = arith.addf %86, %87 : vector<2x1xf32>
    %c0_45 = arith.constant 0 : index
    %c2048 = arith.constant 2048 : index
    %89 = vector.load %arg4[%c0_45, %c2048] : memref<2x3584xbf16, #tpu.memory_space<vmem>>, vector<2x512xbf16>
    %cst_46 = arith.constant dense<0.000000e+00> : vector<2x128xf32>
    %90 = tpu.matmul %89, %39, %cst_46 {dimension_numbers = #tpu.dot_dimension_numbers<[1], [0], [0], [1], [0, 0, 1, 1], [], []>} : vector<2x512xbf16>, vector<512x128xbf16>, vector<2x128xf32> -> vector<2x128xf32>
    %91 = vector.broadcast %40 : vector<1x128xf32> to vector<2x128xf32>
    %92 = arith.addf %90, %91 : vector<2x128xf32>
    %93 = arith.addf %92, %30 : vector<2x128xf32>
    %94 = math.tanh %93 : vector<2x128xf32>
    %95 = vector.broadcast %2 : vector<1x128xf32> to vector<2x128xf32>
    %96 = arith.mulf %94, %95 : vector<2x128xf32>
    %cst_47 = arith.constant dense<0.000000e+00> : vector<2xf32>
    %97 = vector.multi_reduction <add>, %96, %cst_47 [1] : vector<2x128xf32> to vector<2xf32>
    %98 = vector.shape_cast %97 : vector<2xf32> to vector<2x1xf32>
    %99 = vector.broadcast %3 : vector<1x1xf32> to vector<2x1xf32>
    %100 = arith.addf %98, %99 : vector<2x1xf32>
    %c0_48 = arith.constant 0 : index
    %c2560 = arith.constant 2560 : index
    %101 = vector.load %arg4[%c0_48, %c2560] : memref<2x3584xbf16, #tpu.memory_space<vmem>>, vector<2x512xbf16>
    %cst_49 = arith.constant dense<0.000000e+00> : vector<2x128xf32>
    %102 = tpu.matmul %101, %39, %cst_49 {dimension_numbers = #tpu.dot_dimension_numbers<[1], [0], [0], [1], [0, 0, 1, 1], [], []>} : vector<2x512xbf16>, vector<512x128xbf16>, vector<2x128xf32> -> vector<2x128xf32>
    %103 = vector.broadcast %40 : vector<1x128xf32> to vector<2x128xf32>
    %104 = arith.addf %102, %103 : vector<2x128xf32>
    %105 = arith.addf %104, %30 : vector<2x128xf32>
    %106 = math.tanh %105 : vector<2x128xf32>
    %107 = vector.broadcast %2 : vector<1x128xf32> to vector<2x128xf32>
    %108 = arith.mulf %106, %107 : vector<2x128xf32>
    %cst_50 = arith.constant dense<0.000000e+00> : vector<2xf32>
    %109 = vector.multi_reduction <add>, %108, %cst_50 [1] : vector<2x128xf32> to vector<2xf32>
    %110 = vector.shape_cast %109 : vector<2xf32> to vector<2x1xf32>
    %111 = vector.broadcast %3 : vector<1x1xf32> to vector<2x1xf32>
    %112 = arith.addf %110, %111 : vector<2x1xf32>
    %c0_51 = arith.constant 0 : index
    %c3072 = arith.constant 3072 : index
    %113 = vector.load %arg4[%c0_51, %c3072] : memref<2x3584xbf16, #tpu.memory_space<vmem>>, vector<2x512xbf16>
    %cst_52 = arith.constant dense<0.000000e+00> : vector<2x128xf32>
    %114 = tpu.matmul %113, %39, %cst_52 {dimension_numbers = #tpu.dot_dimension_numbers<[1], [0], [0], [1], [0, 0, 1, 1], [], []>} : vector<2x512xbf16>, vector<512x128xbf16>, vector<2x128xf32> -> vector<2x128xf32>
    %115 = vector.broadcast %40 : vector<1x128xf32> to vector<2x128xf32>
    %116 = arith.addf %114, %115 : vector<2x128xf32>
    %117 = arith.addf %116, %30 : vector<2x128xf32>
    %118 = math.tanh %117 : vector<2x128xf32>
    %119 = vector.broadcast %2 : vector<1x128xf32> to vector<2x128xf32>
    %120 = arith.mulf %118, %119 : vector<2x128xf32>
    %cst_53 = arith.constant dense<0.000000e+00> : vector<2xf32>
    %121 = vector.multi_reduction <add>, %120, %cst_53 [1] : vector<2x128xf32> to vector<2xf32>
    %122 = vector.shape_cast %121 : vector<2xf32> to vector<2x1xf32>
    %123 = vector.broadcast %3 : vector<1x1xf32> to vector<2x1xf32>
    %124 = arith.addf %122, %123 : vector<2x1xf32>
    %125 = arith.maximumf %38, %52 : vector<2x1xf32>
    %126 = arith.maximumf %125, %64 : vector<2x1xf32>
    %127 = arith.maximumf %126, %76 : vector<2x1xf32>
    %128 = arith.maximumf %127, %88 : vector<2x1xf32>
    %129 = arith.maximumf %128, %100 : vector<2x1xf32>
    %130 = arith.maximumf %129, %112 : vector<2x1xf32>
    %131 = arith.maximumf %130, %124 : vector<2x1xf32>
    %132 = arith.subf %38, %131 : vector<2x1xf32>
    %133 = math.exp %132 : vector<2x1xf32>
    %134 = arith.subf %52, %131 : vector<2x1xf32>
    %135 = math.exp %134 : vector<2x1xf32>
    %136 = arith.subf %64, %131 : vector<2x1xf32>
    %137 = math.exp %136 : vector<2x1xf32>
    %138 = arith.subf %76, %131 : vector<2x1xf32>
    %139 = math.exp %138 : vector<2x1xf32>
    %140 = arith.subf %88, %131 : vector<2x1xf32>
    %141 = math.exp %140 : vector<2x1xf32>
    %142 = arith.subf %100, %131 : vector<2x1xf32>
    %143 = math.exp %142 : vector<2x1xf32>
    %144 = arith.subf %112, %131 : vector<2x1xf32>
    %145 = math.exp %144 : vector<2x1xf32>
    %146 = arith.subf %124, %131 : vector<2x1xf32>
    %147 = math.exp %146 : vector<2x1xf32>
    %148 = arith.addf %133, %135 : vector<2x1xf32>
    %149 = arith.addf %148, %137 : vector<2x1xf32>
    %150 = arith.addf %149, %139 : vector<2x1xf32>
    %151 = arith.addf %150, %141 : vector<2x1xf32>
    %152 = arith.addf %151, %143 : vector<2x1xf32>
    %153 = arith.addf %152, %145 : vector<2x1xf32>
    %154 = arith.addf %153, %147 : vector<2x1xf32>
    %155 = tpu.reciprocal %154 {approx = true} : vector<2x1xf32> -> vector<2x1xf32>
    %156 = arith.mulf %133, %155 : vector<2x1xf32>
    %157 = vector.broadcast %156 : vector<2x1xf32> to vector<2x128xf32>
    %158 = arith.mulf %157, %11 : vector<2x128xf32>
    %c0_54 = arith.constant 0 : index
    %c0_55 = arith.constant 0 : index
    %159 = vector.load %arg3[%c0_54, %c0_55] : memref<2x896xf32, #tpu.memory_space<vmem>>, vector<2x128xf32>
    %160 = arith.mulf %135, %155 : vector<2x1xf32>
    %161 = vector.broadcast %160 : vector<2x1xf32> to vector<2x128xf32>
    %162 = arith.mulf %161, %159 : vector<2x128xf32>
    %163 = arith.addf %158, %162 : vector<2x128xf32>
    %c0_56 = arith.constant 0 : index
    %c128 = arith.constant 128 : index
    %164 = vector.load %arg3[%c0_56, %c128] : memref<2x896xf32, #tpu.memory_space<vmem>>, vector<2x128xf32>
    %165 = arith.mulf %137, %155 : vector<2x1xf32>
    %166 = vector.broadcast %165 : vector<2x1xf32> to vector<2x128xf32>
    %167 = arith.mulf %166, %164 : vector<2x128xf32>
    %168 = arith.addf %163, %167 : vector<2x128xf32>
    %c0_57 = arith.constant 0 : index
    %c256 = arith.constant 256 : index
    %169 = vector.load %arg3[%c0_57, %c256] : memref<2x896xf32, #tpu.memory_space<vmem>>, vector<2x128xf32>
    %170 = arith.mulf %139, %155 : vector<2x1xf32>
    %171 = vector.broadcast %170 : vector<2x1xf32> to vector<2x128xf32>
    %172 = arith.mulf %171, %169 : vector<2x128xf32>
    %173 = arith.addf %168, %172 : vector<2x128xf32>
    %c0_58 = arith.constant 0 : index
    %c384 = arith.constant 384 : index
    %174 = vector.load %arg3[%c0_58, %c384] : memref<2x896xf32, #tpu.memory_space<vmem>>, vector<2x128xf32>
    %175 = arith.mulf %141, %155 : vector<2x1xf32>
    %176 = vector.broadcast %175 : vector<2x1xf32> to vector<2x128xf32>
    %177 = arith.mulf %176, %174 : vector<2x128xf32>
    %178 = arith.addf %173, %177 : vector<2x128xf32>
    %c0_59 = arith.constant 0 : index
    %c512_60 = arith.constant 512 : index
    %179 = vector.load %arg3[%c0_59, %c512_60] : memref<2x896xf32, #tpu.memory_space<vmem>>, vector<2x128xf32>
    %180 = arith.mulf %143, %155 : vector<2x1xf32>
    %181 = vector.broadcast %180 : vector<2x1xf32> to vector<2x128xf32>
    %182 = arith.mulf %181, %179 : vector<2x128xf32>
    %183 = arith.addf %178, %182 : vector<2x128xf32>
    %c0_61 = arith.constant 0 : index
    %c640 = arith.constant 640 : index
    %184 = vector.load %arg3[%c0_61, %c640] : memref<2x896xf32, #tpu.memory_space<vmem>>, vector<2x128xf32>
    %185 = arith.mulf %145, %155 : vector<2x1xf32>
    %186 = vector.broadcast %185 : vector<2x1xf32> to vector<2x128xf32>
    %187 = arith.mulf %186, %184 : vector<2x128xf32>
    %188 = arith.addf %183, %187 : vector<2x128xf32>
    %c0_62 = arith.constant 0 : index
    %c768 = arith.constant 768 : index
    %189 = vector.load %arg3[%c0_62, %c768] : memref<2x896xf32, #tpu.memory_space<vmem>>, vector<2x128xf32>
    %190 = arith.mulf %147, %155 : vector<2x1xf32>
    %191 = vector.broadcast %190 : vector<2x1xf32> to vector<2x128xf32>
    %192 = arith.mulf %191, %189 : vector<2x128xf32>
    %193 = arith.addf %188, %192 : vector<2x128xf32>
    %194 = arith.mulf %147, %155 : vector<2x1xf32>
    %195 = vector.broadcast %194 : vector<2x1xf32> to vector<2x128xf32>
    %196 = arith.mulf %195, %11 : vector<2x128xf32>
    %cst_63 = arith.constant 1.000000e+00 : f32
    %197 = vector.broadcast %cst_63 : f32 to vector<2x1xf32>
    %198 = arith.subf %197, %194 : vector<2x1xf32>
    %199 = vector.broadcast %198 : vector<2x1xf32> to vector<2x128xf32>
    %200 = arith.mulf %199, %193 : vector<2x128xf32>
    %201 = arith.addf %196, %200 : vector<2x128xf32>
    %c0_64 = arith.constant 0 : index
    %c0_65 = arith.constant 0 : index
    %202 = vector.load %arg17[%c0_64, %c0_65] : memref<2x128xf32, #tpu.memory_space<vmem>>, vector<2x128xf32>
    tpu.vector_store %arg17[%c0_64, %c0_65], %201 {strides = array<i32>} : memref<2x128xf32, #tpu.memory_space<vmem>>, vector<2x128xf32>,
    return
  }
  func.func @transform_0(%arg0: i32) -> (i32, i32) {
    %c0_i32 = arith.constant 0 : i32
    %c0_i32_0 = arith.constant 0 : i32
    return %arg0, %c0_i32 : i32, i32
  }
  func.func @transform_1(%arg0: i32) -> (i32, i32) {
    %c0_i32 = arith.constant 0 : i32
    %c0_i32_0 = arith.constant 0 : i32
    return %arg0, %c0_i32 : i32, i32
  }
  func.func @transform_2(%arg0: i32) -> (i32, i32) {
    %c0_i32 = arith.constant 0 : i32
    %c0_i32_0 = arith.constant 0 : i32
    return %arg0, %c0_i32 : i32, i32
  }
  func.func @transform_3(%arg0: i32) -> (i32, i32) {
    %c0_i32 = arith.constant 0 : i32
    %c0_i32_0 = arith.constant 0 : i32
    return %arg0, %c0_i32 : i32, i32
  }
  func.func @transform_4(%arg0: i32) -> (i32, i32) {
    %c0_i32 = arith.constant 0 : i32
    %c0_i32_0 = arith.constant 0 : i32
    %c0_i32_1 = arith.constant 0 : i32
    return %c0_i32, %c0_i32_0 : i32, i32
  }
  func.func @transform_5(%arg0: i32) -> (i32, i32) {
    %c0_i32 = arith.constant 0 : i32
    %c0_i32_0 = arith.constant 0 : i32
    %c0_i32_1 = arith.constant 0 : i32
    return %c0_i32, %c0_i32_0 : i32, i32
  }
  func.func @transform_6(%arg0: i32) -> (i32, i32) {
    %c0_i32 = arith.constant 0 : i32
    %c0_i32_0 = arith.constant 0 : i32
    %c0_i32_1 = arith.constant 0 : i32
    return %c0_i32, %c0_i32_0 : i32, i32
  }
  func.func @transform_7(%arg0: i32) -> (i32, i32) {
    %c0_i32 = arith.constant 0 : i32
    %c0_i32_0 = arith.constant 0 : i32
    %c0_i32_1 = arith.constant 0 : i32
    return %c0_i32, %c0_i32_0 : i32, i32
  }
  func.func @transform_8(%arg0: i32) -> (i32, i32) {
    %c0_i32 = arith.constant 0 : i32
    %c0_i32_0 = arith.constant 0 : i32
    %c0_i32_1 = arith.constant 0 : i32
    return %c0_i32, %c0_i32_0 : i32, i32
  }
  func.func @transform_9(%arg0: i32) -> (i32, i32) {
    %c0_i32 = arith.constant 0 : i32
    %c0_i32_0 = arith.constant 0 : i32
    %c0_i32_1 = arith.constant 0 : i32
    return %c0_i32, %c0_i32_0 : i32, i32
  }
  func.func @transform_10(%arg0: i32) -> (i32, i32) {
    %c0_i32 = arith.constant 0 : i32
    %c0_i32_0 = arith.constant 0 : i32
    %c0_i32_1 = arith.constant 0 : i32
    return %c0_i32, %c0_i32_0 : i32, i32
  }
  func.func @transform_11(%arg0: i32) -> (i32, i32) {
    %c0_i32 = arith.constant 0 : i32
    %c0_i32_0 = arith.constant 0 : i32
    %c0_i32_1 = arith.constant 0 : i32
    return %c0_i32, %c0_i32_0 : i32, i32
  }
  func.func @transform_12(%arg0: i32) -> (i32, i32) {
    %c0_i32 = arith.constant 0 : i32
    %c0_i32_0 = arith.constant 0 : i32
    %c0_i32_1 = arith.constant 0 : i32
    return %c0_i32, %c0_i32_0 : i32, i32
  }
  func.func @transform_13(%arg0: i32) -> (i32, i32) {
    %c0_i32 = arith.constant 0 : i32
    %c0_i32_0 = arith.constant 0 : i32
    %c0_i32_1 = arith.constant 0 : i32
    return %c0_i32, %c0_i32_0 : i32, i32
  }
  func.func @transform_14(%arg0: i32) -> (i32, i32) {
    %c0_i32 = arith.constant 0 : i32
    %c0_i32_0 = arith.constant 0 : i32
    %c0_i32_1 = arith.constant 0 : i32
    return %c0_i32, %c0_i32_0 : i32, i32
  }
  func.func @transform_15(%arg0: i32) -> (i32, i32) {
    %c0_i32 = arith.constant 0 : i32
    %c0_i32_0 = arith.constant 0 : i32
    %c0_i32_1 = arith.constant 0 : i32
    return %c0_i32, %c0_i32_0 : i32, i32
  }
  func.func @transform_16(%arg0: i32) -> (i32, i32) {
    %c0_i32 = arith.constant 0 : i32
    %c0_i32_0 = arith.constant 0 : i32
    return %arg0, %c0_i32 : i32, i32
  }
}

</mosaic_0001>

<llo_original>
// kernel: tpu_custom_call.1
$region0: #{tpu_custom_call.1}
  #allocation0 [shape = 'u32[]', space=smem, size = 0x4, offset = 0x4, fixed_abs, tag = 'smem constant byte address 0x4 - core index']
  #allocation1 [shape = 'u32[144,128]{1,0:T(1,128)}', space=vmem, size = 0x12000, scoped, tag = 'internal scratch']
  #allocation2 [shape = 'f32[1,1]{1,0:T(1,128)S(1)}', space=vmem, size = 0x200, scoped, tag = 'scoped memory for tpu_custom_call.1']
  %s0 = inlined_call_operand.vmem [shape: f32[2,128], index: 0, kind: input, shape index: {}]
  %s1 = inlined_call_operand.hbm [shape: f32[2,128], index: 1, kind: input, shape index: {}]
  %s2 = inlined_call_operand.hbm [shape: f32[2,896], index: 2, kind: input, shape index: {}]
  %s3 = inlined_call_operand.hbm [shape: bf16[2,3584], index: 3, kind: input, shape index: {}]
  %s4 = inlined_call_operand.hbm [shape: bf16[128,128], index: 4, kind: input, shape index: {}]
  %s5 = inlined_call_operand.vmem [shape: f32[1,128], index: 5, kind: input, shape index: {}]
  %s6 = inlined_call_operand.hbm [shape: bf16[128,128], index: 6, kind: input, shape index: {}]
  %s7 = inlined_call_operand.vmem [shape: f32[1,128], index: 7, kind: input, shape index: {}]
  %s8 = inlined_call_operand.hbm [shape: bf16[128,128], index: 8, kind: input, shape index: {}]
  %s9 = inlined_call_operand.vmem [shape: f32[1,128], index: 9, kind: input, shape index: {}]
  %s10 = inlined_call_operand.hbm [shape: bf16[128,128], index: 10, kind: input, shape index: {}]
  %s11 = inlined_call_operand.vmem [shape: f32[1,128], index: 11, kind: input, shape index: {}]
  %s12 = inlined_call_operand.hbm [shape: bf16[512,128], index: 12, kind: input, shape index: {}]
  %s13 = inlined_call_operand.vmem [shape: f32[1,128], index: 13, kind: input, shape index: {}]
  %s14 = inlined_call_operand.vmem [shape: f32[1,128], index: 14, kind: input, shape index: {}]
  %s15 = inlined_call_operand.<no memory space> [shape: f32[1,1], index: 15, kind: input, shape index: {}]
  %s16 = inlined_call_operand.hbm [shape: f32[2,128], index: 16, kind: output, shape index: {}]
  %s17 = sld [smem:[#allocation0]]
  $region106: #{tpu_custom_call.1} parent=0
    _
  %s19 = ssub.s32 1, %s17
  %s20 = scalar_select 0, %s19, %s17
  %v21 = vstv %s15
  %22 = vst [vmem:[#allocation2] sm:$0x1] %v21
  $region1: #{tpu_custom_call.1} parent=0
    #allocation3 [shape = 'u8[1024]{0}', space=vmem, size = 0x400, scoped, tag = 'input window, operand 1, single buffered']
    #allocation4 [shape = 's32[1]{0}', space=sflag, size = 0x4, scoped, tag = 'scoped memory for tpu_custom_call.1']
    #allocation5 [shape = 's32[1]{0}', space=sflag, size = 0x4, scoped, tag = 'scoped memory for tpu_custom_call.1']
    #allocation6 [shape = 'u8[7168]{0}', space=vmem, size = 0x1c00, scoped, tag = 'input window, operand 2, single buffered']
    #allocation7 [shape = 's32[1]{0}', space=sflag, size = 0x4, scoped, tag = 'scoped memory for tpu_custom_call.1']
    #allocation8 [shape = 'u8[14336]{0}', space=vmem, size = 0x3800, scoped, tag = 'input window, operand 3, single buffered']
    #allocation9 [shape = 'u8[32768]{0}', space=vmem, size = 0x8000, scoped, tag = 'input window, operand 4, single buffered']
    #allocation10 [shape = 's32[1]{0}', space=sflag, size = 0x4, scoped, tag = 'scoped memory for tpu_custom_call.1']
    #allocation11 [shape = 'u8[32768]{0}', space=vmem, size = 0x8000, scoped, tag = 'input window, operand 6, single buffered']
    #allocation12 [shape = 'u8[32768]{0}', space=vmem, size = 0x8000, scoped, tag = 'input window, operand 8, single buffered']
    #allocation13 [shape = 's32[1]{0}', space=sflag, size = 0x4, scoped, tag = 'scoped memory for tpu_custom_call.1']
    #allocation14 [shape = 'u8[32768]{0}', space=vmem, size = 0x8000, scoped, tag = 'input window, operand 10, single buffered']
    #allocation15 [shape = 'u8[131072]{0}', space=vmem, size = 0x20000, scoped, tag = 'input window, operand 12, single buffered']
    #allocation16 [shape = 's32[1]{0}', space=sflag, size = 0x4, scoped, tag = 'scoped memory for tpu_custom_call.1']
    #allocation17 [shape = 'u8[1024]{0}', space=vmem, size = 0x400, scoped, tag = 'output window, operand 0, single buffered']
    %23 = vsyncpa [#allocation4], 0
    %24 = vsyncpa [#allocation7], 0
    %25 = vsyncpa [#allocation10], 0
    %26 = vsyncpa [#allocation13], 0
    %27 = vsyncpa [#allocation16], 0
    %28 = vsyncpa [#allocation5], 0
    // Predicated region
    $region2: #{tpu_custom_call.1} parent=1 // pred_check
      _
    $region3: #{tpu_custom_call.1} parent=1 // pred_check_branch
      %30 = sbr.rel (0) target = $region5
    $region4: #{tpu_custom_call.1} parent=1 // pred_region
      _
    $region5: #{tpu_custom_call.1} parent=1 // pred_fallthru
      _
    // Predicated region
    $region6: #{tpu_custom_call.1} parent=1 // pred_check
      _
    $region7: #{tpu_custom_call.1} parent=1 // pred_check_branch
      %32 = sbr.rel (0) target = $region9
    $region8: #{tpu_custom_call.1} parent=1 // pred_region
      %s34 = ssub.s32 32, 32
      %35 = vsyncadd [#allocation4], %s34
      %s37 = sshll.u32 [#allocation3], 4
      %s38 = int_to_ptr.vmem [resolvable:$true] %s37
      %40 = dma.hbm_to_vmem [thread:$0]  %s1, 32, %s38, [#allocation4]
    $region9: #{tpu_custom_call.1} parent=1 // pred_fallthru
      _
    // Predicated region
    $region10: #{tpu_custom_call.1} parent=1 // pred_check
      _
    $region11: #{tpu_custom_call.1} parent=1 // pred_check_branch
      %42 = sbr.rel (0) target = $region13
    $region12: #{tpu_custom_call.1} parent=1 // pred_region
      %s44 = ssub.s32 224, 224
      %45 = vsyncadd [#allocation7], %s44
      %s47 = sshll.u32 [#allocation6], 4
      %s48 = int_to_ptr.vmem [resolvable:$true] %s47
      %50 = dma.hbm_to_vmem [thread:$0]  %s2, 224, %s48, [#allocation7]
    $region13: #{tpu_custom_call.1} parent=1 // pred_fallthru
      _
    // Predicated region
    $region14: #{tpu_custom_call.1} parent=1 // pred_check
      _
    $region15: #{tpu_custom_call.1} parent=1 // pred_check_branch
      %52 = sbr.rel (0) target = $region17
    $region16: #{tpu_custom_call.1} parent=1 // pred_region
      %s54 = ssub.s32 448, 448
      %55 = vsyncadd [#allocation7], %s54
      %s57 = sshll.u32 [#allocation8], 4
      %s58 = int_to_ptr.vmem [resolvable:$true] %s57
      %60 = dma.hbm_to_vmem [thread:$0]  %s3, 448, %s58, [#allocation7]
    $region17: #{tpu_custom_call.1} parent=1 // pred_fallthru
      _
    // Predicated region
    $region18: #{tpu_custom_call.1} parent=1 // pred_check
      _
    $region19: #{tpu_custom_call.1} parent=1 // pred_check_branch
      %62 = sbr.rel (0) target = $region21
    $region20: #{tpu_custom_call.1} parent=1 // pred_region
      %s64 = ssub.s32 1024, 1024
      %65 = vsyncadd [#allocation10], %s64
      %s66 = sshll.u32 [#allocation9], 4
      %s67 = int_to_ptr.vmem [resolvable:$true] %s66
      %72 = dma.hbm_to_vmem [thread:$0]  %s4, 1024, %s67, [#allocation10], 64, 64, 4
    $region21: #{tpu_custom_call.1} parent=1 // pred_fallthru
      _
    // Predicated region
    $region22: #{tpu_custom_call.1} parent=1 // pred_check
      _
    $region23: #{tpu_custom_call.1} parent=1 // pred_check_branch
      %74 = sbr.rel (0) target = $region25
    $region24: #{tpu_custom_call.1} parent=1 // pred_region
      _
    $region25: #{tpu_custom_call.1} parent=1 // pred_fallthru
      _
    // Predicated region
    $region26: #{tpu_custom_call.1} parent=1 // pred_check
      _
    $region27: #{tpu_custom_call.1} parent=1 // pred_check_branch
      %76 = sbr.rel (0) target = $region29
    $region28: #{tpu_custom_call.1} parent=1 // pred_region
      %s78 = ssub.s32 1024, 1024
      %79 = vsyncadd [#allocation10], %s78
      %s80 = sshll.u32 [#allocation11], 4
      %s81 = int_to_ptr.vmem [resolvable:$true] %s80
      %86 = dma.hbm_to_vmem [thread:$0]  %s6, 1024, %s81, [#allocation10], 64, 64, 4
    $region29: #{tpu_custom_call.1} parent=1 // pred_fallthru
      _
    // Predicated region
    $region30: #{tpu_custom_call.1} parent=1 // pred_check
      _
    $region31: #{tpu_custom_call.1} parent=1 // pred_check_branch
      %88 = sbr.rel (0) target = $region33
    $region32: #{tpu_custom_call.1} parent=1 // pred_region
      _
    $region33: #{tpu_custom_call.1} parent=1 // pred_fallthru
      _
    // Predicated region
    $region34: #{tpu_custom_call.1} parent=1 // pred_check
      _
    $region35: #{tpu_custom_call.1} parent=1 // pred_check_branch
      %90 = sbr.rel (0) target = $region37
    $region36: #{tpu_custom_call.1} parent=1 // pred_region
      %s92 = ssub.s32 1024, 1024
      %93 = vsyncadd [#allocation13], %s92
      %s94 = sshll.u32 [#allocation12], 4
      %s95 = int_to_ptr.vmem [resolvable:$true] %s94
      %100 = dma.hbm_to_vmem [thread:$0]  %s8, 1024, %s95, [#allocation13], 64, 64, 4
    $region37: #{tpu_custom_call.1} parent=1 // pred_fallthru
      _
    // Predicated region
    $region38: #{tpu_custom_call.1} parent=1 // pred_check
      _
    $region39: #{tpu_custom_call.1} parent=1 // pred_check_branch
      %102 = sbr.rel (0) target = $region41
    $region40: #{tpu_custom_call.1} parent=1 // pred_region
      _
    $region41: #{tpu_custom_call.1} parent=1 // pred_fallthru
      _
    // Predicated region
    $region42: #{tpu_custom_call.1} parent=1 // pred_check
      _
    $region43: #{tpu_custom_call.1} parent=1 // pred_check_branch
      %104 = sbr.rel (0) target = $region45
    $region44: #{tpu_custom_call.1} parent=1 // pred_region
      %s106 = ssub.s32 1024, 1024
      %107 = vsyncadd [#allocation13], %s106
      %s108 = sshll.u32 [#allocation14], 4
      %s109 = int_to_ptr.vmem [resolvable:$true] %s108
      %114 = dma.hbm_to_vmem [thread:$0]  %s10, 1024, %s109, [#allocation13], 64, 64, 4
    $region45: #{tpu_custom_call.1} parent=1 // pred_fallthru
      _
    // Predicated region
    $region46: #{tpu_custom_call.1} parent=1 // pred_check
      _
    $region47: #{tpu_custom_call.1} parent=1 // pred_check_branch
      %116 = sbr.rel (0) target = $region49
    $region48: #{tpu_custom_call.1} parent=1 // pred_region
      _
    $region49: #{tpu_custom_call.1} parent=1 // pred_fallthru
      _
    // Predicated region
    $region50: #{tpu_custom_call.1} parent=1 // pred_check
      _
    $region51: #{tpu_custom_call.1} parent=1 // pred_check_branch
      %118 = sbr.rel (0) target = $region53
    $region52: #{tpu_custom_call.1} parent=1 // pred_region
      %s120 = ssub.s32 4096, 4096
      %121 = vsyncadd [#allocation16], %s120
      %s122 = sshll.u32 [#allocation15], 4
      %s123 = int_to_ptr.vmem [resolvable:$true] %s122
      %128 = dma.hbm_to_vmem [thread:$0]  %s12, 4096, %s123, [#allocation16], 64, 64, 4
    $region53: #{tpu_custom_call.1} parent=1 // pred_fallthru
      _
    // Predicated region
    $region54: #{tpu_custom_call.1} parent=1 // pred_check
      _
    $region55: #{tpu_custom_call.1} parent=1 // pred_check_branch
      %130 = sbr.rel (0) target = $region57
    $region56: #{tpu_custom_call.1} parent=1 // pred_region
      _
    $region57: #{tpu_custom_call.1} parent=1 // pred_fallthru
      _
    // Predicated region
    $region58: #{tpu_custom_call.1} parent=1 // pred_check
      _
    $region59: #{tpu_custom_call.1} parent=1 // pred_check_branch
      %132 = sbr.rel (0) target = $region61
    $region60: #{tpu_custom_call.1} parent=1 // pred_region
      _
    $region61: #{tpu_custom_call.1} parent=1 // pred_fallthru
      _
    // Predicated region
    $region62: #{tpu_custom_call.1} parent=1 // pred_check
      _
    $region63: #{tpu_custom_call.1} parent=1 // pred_check_branch
      %134 = sbr.rel (0) target = $region65
    $region64: #{tpu_custom_call.1} parent=1 // pred_region
      _
    $region65: #{tpu_custom_call.1} parent=1 // pred_fallthru
      _
    // Predicated region
    $region66: #{tpu_custom_call.1} parent=1 // pred_check
      _
    $region67: #{tpu_custom_call.1} parent=1 // pred_check_branch
      %136 = sbr.rel (0) target = $region69
    $region68: #{tpu_custom_call.1} parent=1 // pred_region
      %137 = dma.done [#allocation4], 32
    $region69: #{tpu_custom_call.1} parent=1 // pred_fallthru
      _
    // Predicated region
    $region70: #{tpu_custom_call.1} parent=1 // pred_check
      _
    $region71: #{tpu_custom_call.1} parent=1 // pred_check_branch
      %139 = sbr.rel (0) target = $region73
    $region72: #{tpu_custom_call.1} parent=1 // pred_region
      %140 = dma.done [#allocation7], 224
    $region73: #{tpu_custom_call.1} parent=1 // pred_fallthru
      _
    // Predicated region
    $region74: #{tpu_custom_call.1} parent=1 // pred_check
      _
    $region75: #{tpu_custom_call.1} parent=1 // pred_check_branch
      %142 = sbr.rel (0) target = $region77
    $region76: #{tpu_custom_call.1} parent=1 // pred_region
      %143 = dma.done [#allocation7], 448
    $region77: #{tpu_custom_call.1} parent=1 // pred_fallthru
      _
    // Predicated region
    $region78: #{tpu_custom_call.1} parent=1 // pred_check
      _
    $region79: #{tpu_custom_call.1} parent=1 // pred_check_branch
      %145 = sbr.rel (0) target = $region81
    $region80: #{tpu_custom_call.1} parent=1 // pred_region
      %146 = dma.done [#allocation10], 1024
    $region81: #{tpu_custom_call.1} parent=1 // pred_fallthru
      _
    // Predicated region
    $region82: #{tpu_custom_call.1} parent=1 // pred_check
      _
    $region83: #{tpu_custom_call.1} parent=1 // pred_check_branch
      %148 = sbr.rel (0) target = $region85
    $region84: #{tpu_custom_call.1} parent=1 // pred_region
      %149 = dma.done [#allocation10], 1024
    $region85: #{tpu_custom_call.1} parent=1 // pred_fallthru
      _
    // Predicated region
    $region86: #{tpu_custom_call.1} parent=1 // pred_check
      _
    $region87: #{tpu_custom_call.1} parent=1 // pred_check_branch
      %151 = sbr.rel (0) target = $region89
    $region88: #{tpu_custom_call.1} parent=1 // pred_region
      %152 = dma.done [#allocation13], 1024
    $region89: #{tpu_custom_call.1} parent=1 // pred_fallthru
      _
    // Predicated region
    $region90: #{tpu_custom_call.1} parent=1 // pred_check
      _
    $region91: #{tpu_custom_call.1} parent=1 // pred_check_branch
      %154 = sbr.rel (0) target = $region93
    $region92: #{tpu_custom_call.1} parent=1 // pred_region
      %155 = dma.done [#allocation13], 1024
    $region93: #{tpu_custom_call.1} parent=1 // pred_fallthru
      _
    // Predicated region
    $region94: #{tpu_custom_call.1} parent=1 // pred_check
      _
    $region95: #{tpu_custom_call.1} parent=1 // pred_check_branch
      %157 = sbr.rel (0) target = $region97
    $region96: #{tpu_custom_call.1} parent=1 // pred_region
      %158 = dma.done [#allocation16], 4096
    $region97: #{tpu_custom_call.1} parent=1 // pred_fallthru
      _
    %v160 = vld [vmem:[%s0] sm:$0x3]
    %v161 = vld [vmem:[#allocation3] sm:$0x3]
    %v162 = vld [vmem:[%s14] sm:$0x1]
    %v163 = vld [vmem:[#allocation2] sm:$0x1]
    %v164 = vpack.c.bf16 %v161, %v161
    %v165 = vld [vmem:[#allocation9] sm:$0xf]
    %v166 = vld [vmem:[#allocation9 + $0x4] sm:$0xf]
    %v167 = vld [vmem:[#allocation9 + $0x8] sm:$0xf]
    %v168 = vld [vmem:[#allocation9 + $0xc] sm:$0xf]
    %v169 = vld [vmem:[#allocation9 + $0x10] sm:$0xf]
    %v170 = vld [vmem:[#allocation9 + $0x14] sm:$0xf]
    %v171 = vld [vmem:[#allocation9 + $0x18] sm:$0xf]
    %v172 = vld [vmem:[#allocation9 + $0x1c] sm:$0xf]
    %v173 = vld [vmem:[#allocation9 + $0x20] sm:$0xf]
    %v174 = vld [vmem:[#allocation9 + $0x24] sm:$0xf]
    %v175 = vld [vmem:[#allocation9 + $0x28] sm:$0xf]
    %v176 = vld [vmem:[#allocation9 + $0x2c] sm:$0xf]
    %v177 = vld [vmem:[#allocation9 + $0x30] sm:$0xf]
    %v178 = vld [vmem:[#allocation9 + $0x34] sm:$0xf]
    %v179 = vld [vmem:[#allocation9 + $0x38] sm:$0xf]
    %v180 = vld [vmem:[#allocation9 + $0x3c] sm:$0xf]
    %v181 = vld [vmem:[%s5] sm:$0x1]
    %v183 = vlaneseq
    %v184 = vshrl.u32 %v183, 7
    %v185 = vsub.s32 0, %v184
    %v186 = vrot.slane %v181, %v185
    %v204 = vunpack.c.l.b16 %v165
    %v205 = vunpack.c.l.b16 %v166
    %v206 = vunpack.c.l.b16 %v167
    %v207 = vunpack.c.l.b16 %v168
    %v208 = vunpack.c.l.b16 %v169
    %v209 = vunpack.c.l.b16 %v170
    %v210 = vunpack.c.l.b16 %v171
    %v211 = vunpack.c.l.b16 %v172
    %v212 = vunpack.c.l.b16 %v173
    %v213 = vunpack.c.l.b16 %v174
    %v214 = vunpack.c.l.b16 %v175
    %v215 = vunpack.c.l.b16 %v176
    %v216 = vunpack.c.l.b16 %v177
    %v217 = vunpack.c.l.b16 %v178
    %v218 = vunpack.c.l.b16 %v179
    %v219 = vunpack.c.l.b16 %v180
    %v220 = vpack.c.b16 %v205, %v204
    %v221 = vpack.c.b16 %v207, %v206
    %v222 = vpack.c.b16 %v209, %v208
    %v223 = vpack.c.b16 %v211, %v210
    %v224 = vpack.c.b16 %v213, %v212
    %v225 = vpack.c.b16 %v215, %v214
    %v226 = vpack.c.b16 %v217, %v216
    %v227 = vpack.c.b16 %v219, %v218
    %236 = vmatprep.subr.bf16.mxu0 0
    %237 = vmatpush1.bf16.msra.mxu0 %v227
    %238 = vmatprep.subr.bf16.mxu0 0
    %239 = vmatpush1.bf16.msra.mxu0 %v226
    %240 = vmatprep.subr.bf16.mxu0 0
    %241 = vmatpush1.bf16.msra.mxu0 %v225
    %242 = vmatprep.subr.bf16.mxu0 0
    %243 = vmatpush1.bf16.msra.mxu0 %v224
    %244 = vmatprep.subr.bf16.mxu0 0
    %245 = vmatpush1.bf16.msra.mxu0 %v223
    %246 = vmatprep.subr.bf16.mxu0 0
    %247 = vmatpush1.bf16.msra.mxu0 %v222
    %248 = vmatprep.subr.bf16.mxu0 0
    %249 = vmatpush1.bf16.msra.mxu0 %v221
    %250 = vmatprep.subr.bf16.mxu0 0
    %251 = vmatpush1.bf16.msra.mxu0 %v220
    %252 = vmatprep.subr.bf16.mxu0 0
    %253 = vmatpush2.bf16.msra.mxu0 0
    %254 = vmatprep.subr.bf16.mxu0 0
    %255 = vmatpush2.bf16.msra.mxu0 0
    %256 = vmatprep.subr.bf16.mxu0 0
    %257 = vmatpush2.bf16.msra.mxu0 0
    %258 = vmatprep.subr.bf16.mxu0 0
    %259 = vmatpush2.bf16.msra.mxu0 0
    %260 = vmatprep.subr.bf16.mxu0 0
    %261 = vmatpush2.bf16.msra.mxu0 0
    %262 = vmatprep.subr.bf16.mxu0 0
    %263 = vmatpush2.bf16.msra.mxu0 0
    %264 = vmatprep.subr.bf16.mxu0 0
    %265 = vmatpush2.bf16.msra.mxu0 0
    %266 = vmatprep.subr.bf16.mxu0 0
    %267 = vmatpush2.bf16.msra.mxu0 0
    %268 = vmatprep.mubr.bf16.mxu0 0
    %269 = vmatmul.mubr.bf16.gmra.mxu0 %v164
    %v270 = vpop.f32.mrf.mxu0
    %v271 = vadd.f32 %v186, %v270
    %v272 = vpop.f32.mrf.mxu0
    %v273 = vpop.f32.mrf.mxu0
    %v274 = vpop.f32.mrf.mxu0
    %275 = vdwg.mxu0
    %v276 = vmax.f32 %v271, 0.0
    %v277 = vpack.c.bf16 %v276, %v276
    %v278 = vld [vmem:[#allocation11] sm:$0xf]
    %v279 = vld [vmem:[#allocation11 + $0x4] sm:$0xf]
    %v280 = vld [vmem:[#allocation11 + $0x8] sm:$0xf]
    %v281 = vld [vmem:[#allocation11 + $0xc] sm:$0xf]
    %v282 = vld [vmem:[#allocation11 + $0x10] sm:$0xf]
    %v283 = vld [vmem:[#allocation11 + $0x14] sm:$0xf]
    %v284 = vld [vmem:[#allocation11 + $0x18] sm:$0xf]
    %v285 = vld [vmem:[#allocation11 + $0x1c] sm:$0xf]
    %v286 = vld [vmem:[#allocation11 + $0x20] sm:$0xf]
    %v287 = vld [vmem:[#allocation11 + $0x24] sm:$0xf]
    %v288 = vld [vmem:[#allocation11 + $0x28] sm:$0xf]
    %v289 = vld [vmem:[#allocation11 + $0x2c] sm:$0xf]
    %v290 = vld [vmem:[#allocation11 + $0x30] sm:$0xf]
    %v291 = vld [vmem:[#allocation11 + $0x34] sm:$0xf]
    %v292 = vld [vmem:[#allocation11 + $0x38] sm:$0xf]
    %v293 = vld [vmem:[#allocation11 + $0x3c] sm:$0xf]
    %v294 = vld [vmem:[%s7] sm:$0x1]
    %v296 = vlaneseq
    %v297 = vshrl.u32 %v296, 7
    %v298 = vsub.s32 0, %v297
    %v299 = vrot.slane %v294, %v298
    %v317 = vunpack.c.l.b16 %v278
    %v318 = vunpack.c.l.b16 %v279
    %v319 = vunpack.c.l.b16 %v280
    %v320 = vunpack.c.l.b16 %v281
    %v321 = vunpack.c.l.b16 %v282
    %v322 = vunpack.c.l.b16 %v283
    %v323 = vunpack.c.l.b16 %v284
    %v324 = vunpack.c.l.b16 %v285
    %v325 = vunpack.c.l.b16 %v286
    %v326 = vunpack.c.l.b16 %v287
    %v327 = vunpack.c.l.b16 %v288
    %v328 = vunpack.c.l.b16 %v289
    %v329 = vunpack.c.l.b16 %v290
    %v330 = vunpack.c.l.b16 %v291
    %v331 = vunpack.c.l.b16 %v292
    %v332 = vunpack.c.l.b16 %v293
    %v333 = vpack.c.b16 %v318, %v317
    %v334 = vpack.c.b16 %v320, %v319
    %v335 = vpack.c.b16 %v322, %v321
    %v336 = vpack.c.b16 %v324, %v323
    %v337 = vpack.c.b16 %v326, %v325
    %v338 = vpack.c.b16 %v328, %v327
    %v339 = vpack.c.b16 %v330, %v329
    %v340 = vpack.c.b16 %v332, %v331
    %349 = vmatprep.subr.bf16.mxu0 0
    %350 = vmatpush1.bf16.msra.mxu0 %v340
    %351 = vmatprep.subr.bf16.mxu0 0
    %352 = vmatpush1.bf16.msra.mxu0 %v339
    %353 = vmatprep.subr.bf16.mxu0 0
    %354 = vmatpush1.bf16.msra.mxu0 %v338
    %355 = vmatprep.subr.bf16.mxu0 0
    %356 = vmatpush1.bf16.msra.mxu0 %v337
    %357 = vmatprep.subr.bf16.mxu0 0
    %358 = vmatpush1.bf16.msra.mxu0 %v336
    %359 = vmatprep.subr.bf16.mxu0 0
    %360 = vmatpush1.bf16.msra.mxu0 %v335
    %361 = vmatprep.subr.bf16.mxu0 0
    %362 = vmatpush1.bf16.msra.mxu0 %v334
    %363 = vmatprep.subr.bf16.mxu0 0
    %364 = vmatpush1.bf16.msra.mxu0 %v333
    %365 = vmatprep.subr.bf16.mxu0 0
    %366 = vmatpush2.bf16.msra.mxu0 0
    %367 = vmatprep.subr.bf16.mxu0 0
    %368 = vmatpush2.bf16.msra.mxu0 0
    %369 = vmatprep.subr.bf16.mxu0 0
    %370 = vmatpush2.bf16.msra.mxu0 0
    %371 = vmatprep.subr.bf16.mxu0 0
    %372 = vmatpush2.bf16.msra.mxu0 0
    %373 = vmatprep.subr.bf16.mxu0 0
    %374 = vmatpush2.bf16.msra.mxu0 0
    %375 = vmatprep.subr.bf16.mxu0 0
    %376 = vmatpush2.bf16.msra.mxu0 0
    %377 = vmatprep.subr.bf16.mxu0 0
    %378 = vmatpush2.bf16.msra.mxu0 0
    %379 = vmatprep.subr.bf16.mxu0 0
    %380 = vmatpush2.bf16.msra.mxu0 0
    %381 = vmatprep.mubr.bf16.mxu0 0
    %382 = vmatmul.mubr.bf16.gmra.mxu0 %v277
    %v383 = vpop.f32.mrf.mxu0
    %v384 = vadd.f32 %v299, %v383
    %v385 = vpop.f32.mrf.mxu0
    %v386 = vpop.f32.mrf.mxu0
    %v387 = vpop.f32.mrf.mxu0
    %388 = vdwg.mxu0
    %v389 = vpack.c.bf16 %v160, %v160
    %v390 = vld [vmem:[#allocation12] sm:$0xf]
    %v391 = vld [vmem:[#allocation12 + $0x4] sm:$0xf]
    %v392 = vld [vmem:[#allocation12 + $0x8] sm:$0xf]
    %v393 = vld [vmem:[#allocation12 + $0xc] sm:$0xf]
    %v394 = vld [vmem:[#allocation12 + $0x10] sm:$0xf]
    %v395 = vld [vmem:[#allocation12 + $0x14] sm:$0xf]
    %v396 = vld [vmem:[#allocation12 + $0x18] sm:$0xf]
    %v397 = vld [vmem:[#allocation12 + $0x1c] sm:$0xf]
    %v398 = vld [vmem:[#allocation12 + $0x20] sm:$0xf]
    %v399 = vld [vmem:[#allocation12 + $0x24] sm:$0xf]
    %v400 = vld [vmem:[#allocation12 + $0x28] sm:$0xf]
    %v401 = vld [vmem:[#allocation12 + $0x2c] sm:$0xf]
    %v402 = vld [vmem:[#allocation12 + $0x30] sm:$0xf]
    %v403 = vld [vmem:[#allocation12 + $0x34] sm:$0xf]
    %v404 = vld [vmem:[#allocation12 + $0x38] sm:$0xf]
    %v405 = vld [vmem:[#allocation12 + $0x3c] sm:$0xf]
    %v406 = vld [vmem:[%s9] sm:$0x1]
    %v408 = vlaneseq
    %v409 = vshrl.u32 %v408, 7
    %v410 = vsub.s32 0, %v409
    %v411 = vrot.slane %v406, %v410
    %v429 = vunpack.c.l.b16 %v390
    %v430 = vunpack.c.l.b16 %v391
    %v431 = vunpack.c.l.b16 %v392
    %v432 = vunpack.c.l.b16 %v393
    %v433 = vunpack.c.l.b16 %v394
    %v434 = vunpack.c.l.b16 %v395
    %v435 = vunpack.c.l.b16 %v396
    %v436 = vunpack.c.l.b16 %v397
    %v437 = vunpack.c.l.b16 %v398
    %v438 = vunpack.c.l.b16 %v399
    %v439 = vunpack.c.l.b16 %v400
    %v440 = vunpack.c.l.b16 %v401
    %v441 = vunpack.c.l.b16 %v402
    %v442 = vunpack.c.l.b16 %v403
    %v443 = vunpack.c.l.b16 %v404
    %v444 = vunpack.c.l.b16 %v405
    %v445 = vpack.c.b16 %v430, %v429
    %v446 = vpack.c.b16 %v432, %v431
    %v447 = vpack.c.b16 %v434, %v433
    %v448 = vpack.c.b16 %v436, %v435
    %v449 = vpack.c.b16 %v438, %v437
    %v450 = vpack.c.b16 %v440, %v439
    %v451 = vpack.c.b16 %v442, %v441
    %v452 = vpack.c.b16 %v444, %v443
    %461 = vmatprep.subr.bf16.mxu0 0
    %462 = vmatpush1.bf16.msra.mxu0 %v452
    %463 = vmatprep.subr.bf16.mxu0 0
    %464 = vmatpush1.bf16.msra.mxu0 %v451
    %465 = vmatprep.subr.bf16.mxu0 0
    %466 = vmatpush1.bf16.msra.mxu0 %v450
    %467 = vmatprep.subr.bf16.mxu0 0
    %468 = vmatpush1.bf16.msra.mxu0 %v449
    %469 = vmatprep.subr.bf16.mxu0 0
    %470 = vmatpush1.bf16.msra.mxu0 %v448
    %471 = vmatprep.subr.bf16.mxu0 0
    %472 = vmatpush1.bf16.msra.mxu0 %v447
    %473 = vmatprep.subr.bf16.mxu0 0
    %474 = vmatpush1.bf16.msra.mxu0 %v446
    %475 = vmatprep.subr.bf16.mxu0 0
    %476 = vmatpush1.bf16.msra.mxu0 %v445
    %477 = vmatprep.subr.bf16.mxu0 0
    %478 = vmatpush2.bf16.msra.mxu0 0
    %479 = vmatprep.subr.bf16.mxu0 0
    %480 = vmatpush2.bf16.msra.mxu0 0
    %481 = vmatprep.subr.bf16.mxu0 0
    %482 = vmatpush2.bf16.msra.mxu0 0
    %483 = vmatprep.subr.bf16.mxu0 0
    %484 = vmatpush2.bf16.msra.mxu0 0
    %485 = vmatprep.subr.bf16.mxu0 0
    %486 = vmatpush2.bf16.msra.mxu0 0
    %487 = vmatprep.subr.bf16.mxu0 0
    %488 = vmatpush2.bf16.msra.mxu0 0
    %489 = vmatprep.subr.bf16.mxu0 0
    %490 = vmatpush2.bf16.msra.mxu0 0
    %491 = vmatprep.subr.bf16.mxu0 0
    %492 = vmatpush2.bf16.msra.mxu0 0
    %493 = vmatprep.mubr.bf16.mxu0 0
    %494 = vmatmul.mubr.bf16.gmra.mxu0 %v389
    %v495 = vpop.f32.mrf.mxu0
    %v496 = vadd.f32 %v411, %v495
    %v497 = vpop.f32.mrf.mxu0
    %v498 = vpop.f32.mrf.mxu0
    %v499 = vpop.f32.mrf.mxu0
    %500 = vdwg.mxu0
    %v501 = vtanh.pop %v496
    %v502 = vpack.c.bf16 %v501, %v501
    %v503 = vld [vmem:[#allocation14] sm:$0xf]
    %v504 = vld [vmem:[#allocation14 + $0x4] sm:$0xf]
    %v505 = vld [vmem:[#allocation14 + $0x8] sm:$0xf]
    %v506 = vld [vmem:[#allocation14 + $0xc] sm:$0xf]
    %v507 = vld [vmem:[#allocation14 + $0x10] sm:$0xf]
    %v508 = vld [vmem:[#allocation14 + $0x14] sm:$0xf]
    %v509 = vld [vmem:[#allocation14 + $0x18] sm:$0xf]
    %v510 = vld [vmem:[#allocation14 + $0x1c] sm:$0xf]
    %v511 = vld [vmem:[#allocation14 + $0x20] sm:$0xf]
    %v512 = vld [vmem:[#allocation14 + $0x24] sm:$0xf]
    %v513 = vld [vmem:[#allocation14 + $0x28] sm:$0xf]
    %v514 = vld [vmem:[#allocation14 + $0x2c] sm:$0xf]
    %v515 = vld [vmem:[#allocation14 + $0x30] sm:$0xf]
    %v516 = vld [vmem:[#allocation14 + $0x34] sm:$0xf]
    %v517 = vld [vmem:[#allocation14 + $0x38] sm:$0xf]
    %v518 = vld [vmem:[#allocation14 + $0x3c] sm:$0xf]
    %v519 = vld [vmem:[%s11] sm:$0x1]
    %v521 = vlaneseq
    %v522 = vshrl.u32 %v521, 7
    %v523 = vsub.s32 0, %v522
    %v524 = vrot.slane %v519, %v523
    %v542 = vunpack.c.l.b16 %v503
    %v543 = vunpack.c.l.b16 %v504
    %v544 = vunpack.c.l.b16 %v505
    %v545 = vunpack.c.l.b16 %v506
    %v546 = vunpack.c.l.b16 %v507
    %v547 = vunpack.c.l.b16 %v508
    %v548 = vunpack.c.l.b16 %v509
    %v549 = vunpack.c.l.b16 %v510
    %v550 = vunpack.c.l.b16 %v511
    %v551 = vunpack.c.l.b16 %v512
    %v552 = vunpack.c.l.b16 %v513
    %v553 = vunpack.c.l.b16 %v514
    %v554 = vunpack.c.l.b16 %v515
    %v555 = vunpack.c.l.b16 %v516
    %v556 = vunpack.c.l.b16 %v517
    %v557 = vunpack.c.l.b16 %v518
    %v558 = vpack.c.b16 %v543, %v542
    %v559 = vpack.c.b16 %v545, %v544
    %v560 = vpack.c.b16 %v547, %v546
    %v561 = vpack.c.b16 %v549, %v548
    %v562 = vpack.c.b16 %v551, %v550
    %v563 = vpack.c.b16 %v553, %v552
    %v564 = vpack.c.b16 %v555, %v554
    %v565 = vpack.c.b16 %v557, %v556
    %574 = vmatprep.subr.bf16.mxu0 0
    %575 = vmatpush1.bf16.msra.mxu0 %v565
    %576 = vmatprep.subr.bf16.mxu0 0
    %577 = vmatpush1.bf16.msra.mxu0 %v564
    %578 = vmatprep.subr.bf16.mxu0 0
    %579 = vmatpush1.bf16.msra.mxu0 %v563
    %580 = vmatprep.subr.bf16.mxu0 0
    %581 = vmatpush1.bf16.msra.mxu0 %v562
    %582 = vmatprep.subr.bf16.mxu0 0
    %583 = vmatpush1.bf16.msra.mxu0 %v561
    %584 = vmatprep.subr.bf16.mxu0 0
    %585 = vmatpush1.bf16.msra.mxu0 %v560
    %586 = vmatprep.subr.bf16.mxu0 0
    %587 = vmatpush1.bf16.msra.mxu0 %v559
    %588 = vmatprep.subr.bf16.mxu0 0
    %589 = vmatpush1.bf16.msra.mxu0 %v558
    %590 = vmatprep.subr.bf16.mxu0 0
    %591 = vmatpush2.bf16.msra.mxu0 0
    %592 = vmatprep.subr.bf16.mxu0 0
    %593 = vmatpush2.bf16.msra.mxu0 0
    %594 = vmatprep.subr.bf16.mxu0 0
    %595 = vmatpush2.bf16.msra.mxu0 0
    %596 = vmatprep.subr.bf16.mxu0 0
    %597 = vmatpush2.bf16.msra.mxu0 0
    %598 = vmatprep.subr.bf16.mxu0 0
    %599 = vmatpush2.bf16.msra.mxu0 0
    %600 = vmatprep.subr.bf16.mxu0 0
    %601 = vmatpush2.bf16.msra.mxu0 0
    %602 = vmatprep.subr.bf16.mxu0 0
    %603 = vmatpush2.bf16.msra.mxu0 0
    %604 = vmatprep.subr.bf16.mxu0 0
    %605 = vmatpush2.bf16.msra.mxu0 0
    %606 = vmatprep.mubr.bf16.mxu0 0
    %607 = vmatmul.mubr.bf16.gmra.mxu0 %v502
    %v608 = vpop.f32.mrf.mxu0
    %v609 = vadd.f32 %v524, %v608
    %v610 = vpop.f32.mrf.mxu0
    %v611 = vpop.f32.mrf.mxu0
    %v612 = vpop.f32.mrf.mxu0
    %613 = vdwg.mxu0
    %v614 = vadd.f32 %v384, %v609
    %v615 = vtanh.pop %v614
    %v617 = vlaneseq
    %v618 = vshrl.u32 %v617, 7
    %v619 = vsub.s32 0, %v618
    %v620 = vrot.slane %v162, %v619
    %v622 = vmul.f32 %v615, %v620
    %vm623 = vcmask 1041408
    %v624 = vsel %vm623, %v622, 0.0
    %625 = vadd.xlane.f32.xlu0 %v624
    %v626 = vpop.xlane.xlu0 %625
    %v628 = vlaneseq
    %v629 = vshrl.u32 %v628, 7
    %v630 = vsub.s32 0, %v629
    %v631 = vrot.slane %v163, %v630
    %v633 = vadd.f32 %v626, %v631
    %v634 = vld [vmem:[#allocation15] sm:$0xf]
    %v635 = vld [vmem:[#allocation15 + $0x4] sm:$0xf]
    %v636 = vld [vmem:[#allocation15 + $0x8] sm:$0xf]
    %v637 = vld [vmem:[#allocation15 + $0xc] sm:$0xf]
    %v638 = vld [vmem:[#allocation15 + $0x10] sm:$0xf]
    %v639 = vld [vmem:[#allocation15 + $0x14] sm:$0xf]
    %v640 = vld [vmem:[#allocation15 + $0x18] sm:$0xf]
    %v641 = vld [vmem:[#allocation15 + $0x1c] sm:$0xf]
    %v642 = vld [vmem:[#allocation15 + $0x20] sm:$0xf]
    %v643 = vld [vmem:[#allocation15 + $0x24] sm:$0xf]
    %v644 = vld [vmem:[#allocation15 + $0x28] sm:$0xf]
    %v645 = vld [vmem:[#allocation15 + $0x2c] sm:$0xf]
    %v646 = vld [vmem:[#allocation15 + $0x30] sm:$0xf]
    %v647 = vld [vmem:[#allocation15 + $0x34] sm:$0xf]
    %v648 = vld [vmem:[#allocation15 + $0x38] sm:$0xf]
    %v649 = vld [vmem:[#allocation15 + $0x3c] sm:$0xf]
    %v650 = vld [vmem:[#allocation15 + $0x40] sm:$0xf]
    %v651 = vld [vmem:[#allocation15 + $0x44] sm:$0xf]
    %v652 = vld [vmem:[#allocation15 + $0x48] sm:$0xf]
    %v653 = vld [vmem:[#allocation15 + $0x4c] sm:$0xf]
    %v654 = vld [vmem:[#allocation15 + $0x50] sm:$0xf]
    %v655 = vld [vmem:[#allocation15 + $0x54] sm:$0xf]
    %v656 = vld [vmem:[#allocation15 + $0x58] sm:$0xf]
    %v657 = vld [vmem:[#allocation15 + $0x5c] sm:$0xf]
    %v658 = vld [vmem:[#allocation15 + $0x60] sm:$0xf]
    %v659 = vld [vmem:[#allocation15 + $0x64] sm:$0xf]
    %v660 = vld [vmem:[#allocation15 + $0x68] sm:$0xf]
    %v661 = vld [vmem:[#allocation15 + $0x6c] sm:$0xf]
    %v662 = vld [vmem:[#allocation15 + $0x70] sm:$0xf]
    %v663 = vld [vmem:[#allocation15 + $0x74] sm:$0xf]
    %v664 = vld [vmem:[#allocation15 + $0x78] sm:$0xf]
    %v665 = vld [vmem:[#allocation15 + $0x7c] sm:$0xf]
    %v666 = vld [vmem:[#allocation15 + $0x80] sm:$0xf]
    %v667 = vld [vmem:[#allocation15 + $0x84] sm:$0xf]
    %v668 = vld [vmem:[#allocation15 + $0x88] sm:$0xf]
    %v669 = vld [vmem:[#allocation15 + $0x8c] sm:$0xf]
    %v670 = vld [vmem:[#allocation15 + $0x90] sm:$0xf]
    %v671 = vld [vmem:[#allocation15 + $0x94] sm:$0xf]
    %v672 = vld [vmem:[#allocation15 + $0x98] sm:$0xf]
    %v673 = vld [vmem:[#allocation15 + $0x9c] sm:$0xf]
    %v674 = vld [vmem:[#allocation15 + $0xa0] sm:$0xf]
    %v675 = vld [vmem:[#allocation15 + $0xa4] sm:$0xf]
    %v676 = vld [vmem:[#allocation15 + $0xa8] sm:$0xf]
    %v677 = vld [vmem:[#allocation15 + $0xac] sm:$0xf]
    %v678 = vld [vmem:[#allocation15 + $0xb0] sm:$0xf]
    %v679 = vld [vmem:[#allocation15 + $0xb4] sm:$0xf]
    %v680 = vld [vmem:[#allocation15 + $0xb8] sm:$0xf]
    %v681 = vld [vmem:[#allocation15 + $0xbc] sm:$0xf]
    %v682 = vld [vmem:[#allocation15 + $0xc0] sm:$0xf]
    %v683 = vld [vmem:[#allocation15 + $0xc4] sm:$0xf]
    %v684 = vld [vmem:[#allocation15 + $0xc8] sm:$0xf]
    %v685 = vld [vmem:[#allocation15 + $0xcc] sm:$0xf]
    %v686 = vld [vmem:[#allocation15 + $0xd0] sm:$0xf]
    %v687 = vld [vmem:[#allocation15 + $0xd4] sm:$0xf]
    %v688 = vld [vmem:[#allocation15 + $0xd8] sm:$0xf]
    %v689 = vld [vmem:[#allocation15 + $0xdc] sm:$0xf]
    %v690 = vld [vmem:[#allocation15 + $0xe0] sm:$0xf]
    %v691 = vld [vmem:[#allocation15 + $0xe4] sm:$0xf]
    %v692 = vld [vmem:[#allocation15 + $0xe8] sm:$0xf]
    %v693 = vld [vmem:[#allocation15 + $0xec] sm:$0xf]
    %v694 = vld [vmem:[#allocation15 + $0xf0] sm:$0xf]
    %v695 = vld [vmem:[#allocation15 + $0xf4] sm:$0xf]
    %v696 = vld [vmem:[#allocation15 + $0xf8] sm:$0xf]
    %v697 = vld [vmem:[#allocation15 + $0xfc] sm:$0xf]
    %v698 = vld [vmem:[%s13] sm:$0x1]
    %v699 = vld [vmem:[#allocation8] sm:$0xf]
    %v701 = vlaneseq
    %v702 = vshrl.u32 %v701, 7
    %v703 = vsub.s32 0, %v702
    %v704 = vrot.slane %v698, %v703
    %v708 = vunpack.c.l.s4 1966171168
    %v709 = vunpack.c.0.s8 %v708
    %v710 = vlaneseq
    %v711 = vshrl.u32 %v710, 7
    %v712 = vsub.s32 %v709, %v711
    %v713 = vrot.slane %v699, %v712
    %v714 = vcombine.high %v713, %v713
    %v716 = vunpack.c.l.s4 1966171168
    %v717 = vunpack.c.0.s8 %v716
    %v718 = vlaneseq
    %v719 = vshrl.u32 %v718, 7
    %v720 = vsub.s32 %v717, %v719
    %v721 = vrot.slane %v713, %v720
    %v723 = vunpack.c.l.s4 1966171168
    %v724 = vunpack.c.0.s8 %v723
    %v725 = vlaneseq
    %v726 = vshrl.u32 %v725, 7
    %v727 = vsub.s32 %v724, %v726
    %v728 = vrot.slane %v714, %v727
    %v729 = vcombine.high %v721, %v721
    %v730 = vcombine.high %v728, %v728
    %v799 = vunpack.c.l.b16 %v634
    %v800 = vunpack.c.l.b16 %v635
    %v801 = vunpack.c.l.b16 %v636
    %v802 = vunpack.c.l.b16 %v637
    %v803 = vunpack.c.l.b16 %v638
    %v804 = vunpack.c.l.b16 %v639
    %v805 = vunpack.c.l.b16 %v640
    %v806 = vunpack.c.l.b16 %v641
    %v807 = vunpack.c.l.b16 %v642
    %v808 = vunpack.c.l.b16 %v643
    %v809 = vunpack.c.l.b16 %v644
    %v810 = vunpack.c.l.b16 %v645
    %v811 = vunpack.c.l.b16 %v646
    %v812 = vunpack.c.l.b16 %v647
    %v813 = vunpack.c.l.b16 %v648
    %v814 = vunpack.c.l.b16 %v649
    %v815 = vunpack.c.l.b16 %v650
    %v816 = vunpack.c.l.b16 %v651
    %v817 = vunpack.c.l.b16 %v652
    %v818 = vunpack.c.l.b16 %v653
    %v819 = vunpack.c.l.b16 %v654
    %v820 = vunpack.c.l.b16 %v655
    %v821 = vunpack.c.l.b16 %v656
    %v822 = vunpack.c.l.b16 %v657
    %v823 = vunpack.c.l.b16 %v658
    %v824 = vunpack.c.l.b16 %v659
    %v825 = vunpack.c.l.b16 %v660
    %v826 = vunpack.c.l.b16 %v661
    %v827 = vunpack.c.l.b16 %v662
    %v828 = vunpack.c.l.b16 %v663
    %v829 = vunpack.c.l.b16 %v664
    %v830 = vunpack.c.l.b16 %v665
    %v831 = vunpack.c.l.b16 %v666
    %v832 = vunpack.c.l.b16 %v667
    %v833 = vunpack.c.l.b16 %v668
    %v834 = vunpack.c.l.b16 %v669
    %v835 = vunpack.c.l.b16 %v670
    %v836 = vunpack.c.l.b16 %v671
    %v837 = vunpack.c.l.b16 %v672
    %v838 = vunpack.c.l.b16 %v673
    %v839 = vunpack.c.l.b16 %v674
    %v840 = vunpack.c.l.b16 %v675
    %v841 = vunpack.c.l.b16 %v676
    %v842 = vunpack.c.l.b16 %v677
    %v843 = vunpack.c.l.b16 %v678
    %v844 = vunpack.c.l.b16 %v679
    %v845 = vunpack.c.l.b16 %v680
    %v846 = vunpack.c.l.b16 %v681
    %v847 = vunpack.c.l.b16 %v682
    %v848 = vunpack.c.l.b16 %v683
    %v849 = vunpack.c.l.b16 %v684
    %v850 = vunpack.c.l.b16 %v685
    %v851 = vunpack.c.l.b16 %v686
    %v852 = vunpack.c.l.b16 %v687
    %v853 = vunpack.c.l.b16 %v688
    %v854 = vunpack.c.l.b16 %v689
    %v855 = vunpack.c.l.b16 %v690
    %v856 = vunpack.c.l.b16 %v691
    %v857 = vunpack.c.l.b16 %v692
    %v858 = vunpack.c.l.b16 %v693
    %v859 = vunpack.c.l.b16 %v694
    %v860 = vunpack.c.l.b16 %v695
    %v861 = vunpack.c.l.b16 %v696
    %v862 = vunpack.c.l.b16 %v697
    %v863 = vpack.c.b16 %v800, %v799
    %v864 = vpack.c.b16 %v802, %v801
    %v865 = vpack.c.b16 %v804, %v803
    %v866 = vpack.c.b16 %v806, %v805
    %v867 = vpack.c.b16 %v808, %v807
    %v868 = vpack.c.b16 %v810, %v809
    %v869 = vpack.c.b16 %v812, %v811
    %v870 = vpack.c.b16 %v814, %v813
    %v871 = vpack.c.b16 %v816, %v815
    %v872 = vpack.c.b16 %v818, %v817
    %v873 = vpack.c.b16 %v820, %v819
    %v874 = vpack.c.b16 %v822, %v821
    %v875 = vpack.c.b16 %v824, %v823
    %v876 = vpack.c.b16 %v826, %v825
    %v877 = vpack.c.b16 %v828, %v827
    %v878 = vpack.c.b16 %v830, %v829
    %v879 = vpack.c.b16 %v832, %v831
    %v880 = vpack.c.b16 %v834, %v833
    %v881 = vpack.c.b16 %v836, %v835
    %v882 = vpack.c.b16 %v838, %v837
    %v883 = vpack.c.b16 %v840, %v839
    %v884 = vpack.c.b16 %v842, %v841
    %v885 = vpack.c.b16 %v844, %v843
    %v886 = vpack.c.b16 %v846, %v845
    %v887 = vpack.c.b16 %v848, %v847
    %v888 = vpack.c.b16 %v850, %v849
    %v889 = vpack.c.b16 %v852, %v851
    %v890 = vpack.c.b16 %v854, %v853
    %v891 = vpack.c.b16 %v856, %v855
    %v892 = vpack.c.b16 %v858, %v857
    %v893 = vpack.c.b16 %v860, %v859
    %v894 = vpack.c.b16 %v862, %v861
    %927 = vmatprep.subr.bf16.mxu0 0
    %928 = vmatpush1.bf16.msra.mxu0 %v870
    %929 = vmatprep.subr.bf16.mxu0 0
    %930 = vmatpush1.bf16.msra.mxu0 %v869
    %931 = vmatprep.subr.bf16.mxu0 0
    %932 = vmatpush1.bf16.msra.mxu0 %v868
    %933 = vmatprep.subr.bf16.mxu0 0
    %934 = vmatpush1.bf16.msra.mxu0 %v867
    %935 = vmatprep.subr.bf16.mxu0 0
    %936 = vmatpush1.bf16.msra.mxu0 %v866
    %937 = vmatprep.subr.bf16.mxu0 0
    %938 = vmatpush1.bf16.msra.mxu0 %v865
    %939 = vmatprep.subr.bf16.mxu0 0
    %940 = vmatpush1.bf16.msra.mxu0 %v864
    %941 = vmatprep.subr.bf16.mxu0 0
    %942 = vmatpush1.bf16.msra.mxu0 %v863
    %943 = vmatprep.subr.bf16.mxu0 0
    %944 = vmatpush2.bf16.msra.mxu0 %v878
    %945 = vmatprep.subr.bf16.mxu0 0
    %946 = vmatpush2.bf16.msra.mxu0 %v877
    %947 = vmatprep.subr.bf16.mxu0 0
    %948 = vmatpush2.bf16.msra.mxu0 %v876
    %949 = vmatprep.subr.bf16.mxu0 0
    %950 = vmatpush2.bf16.msra.mxu0 %v875
    %951 = vmatprep.subr.bf16.mxu0 0
    %952 = vmatpush2.bf16.msra.mxu0 %v874
    %953 = vmatprep.subr.bf16.mxu0 0
    %954 = vmatpush2.bf16.msra.mxu0 %v873
    %955 = vmatprep.subr.bf16.mxu0 0
    %956 = vmatpush2.bf16.msra.mxu0 %v872
    %957 = vmatprep.subr.bf16.mxu0 0
    %958 = vmatpush2.bf16.msra.mxu0 %v871
    %959 = vmatprep.mubr.bf16.mxu0 %v728
    %960 = vmatmul.mubr.bf16.gmra.mxu0 %v721
    %v961 = vpop.f32.mrf.mxu0
    %v962 = vadd.f32 %v704, %v961
    %v963 = vpop.f32.mrf.mxu0
    %v964 = vpop.f32.mrf.mxu0
    %v965 = vpop.f32.mrf.mxu0
    %966 = vdwg.mxu0
    %967 = vmatprep.subr.bf16.mxu0 0
    %968 = vmatpush1.bf16.msra.mxu0 %v886
    %969 = vmatprep.subr.bf16.mxu0 0
    %970 = vmatpush1.bf16.msra.mxu0 %v885
    %971 = vmatprep.subr.bf16.mxu0 0
    %972 = vmatpush1.bf16.msra.mxu0 %v884
    %973 = vmatprep.subr.bf16.mxu0 0
    %974 = vmatpush1.bf16.msra.mxu0 %v883
    %975 = vmatprep.subr.bf16.mxu0 0
    %976 = vmatpush1.bf16.msra.mxu0 %v882
    %977 = vmatprep.subr.bf16.mxu0 0
    %978 = vmatpush1.bf16.msra.mxu0 %v881
    %979 = vmatprep.subr.bf16.mxu0 0
    %980 = vmatpush1.bf16.msra.mxu0 %v880
    %981 = vmatprep.subr.bf16.mxu0 0
    %982 = vmatpush1.bf16.msra.mxu0 %v879
    %983 = vmatprep.subr.bf16.mxu0 0
    %984 = vmatpush2.bf16.msra.mxu0 %v894
    %985 = vmatprep.subr.bf16.mxu0 0
    %986 = vmatpush2.bf16.msra.mxu0 %v893
    %987 = vmatprep.subr.bf16.mxu0 0
    %988 = vmatpush2.bf16.msra.mxu0 %v892
    %989 = vmatprep.subr.bf16.mxu0 0
    %990 = vmatpush2.bf16.msra.mxu0 %v891
    %991 = vmatprep.subr.bf16.mxu0 0
    %992 = vmatpush2.bf16.msra.mxu0 %v890
    %993 = vmatprep.subr.bf16.mxu0 0
    %994 = vmatpush2.bf16.msra.mxu0 %v889
    %995 = vmatprep.subr.bf16.mxu0 0
    %996 = vmatpush2.bf16.msra.mxu0 %v888
    %997 = vmatprep.subr.bf16.mxu0 0
    %998 = vmatpush2.bf16.msra.mxu0 %v887
    %999 = vmatprep.mubr.bf16.mxu0 %v730
    %1000 = vmatmul.mubr.bf16.gmra.mxu0 %v729
    %v1001 = vpop.f32.mrf.mxu0
    %v1002 = vadd.f32 %v962, %v1001
    %v1003 = vpop.f32.mrf.mxu0
    %v1004 = vpop.f32.mrf.mxu0
    %v1005 = vpop.f32.mrf.mxu0
    %1006 = vdwg.mxu0
    %v1007 = vadd.f32 %v1002, %v609
    %v1008 = vtanh.pop %v1007
    %v1009 = vmul.f32 %v1008, %v620
    %v1010 = vsel %vm623, %v1009, 0.0
    %1011 = vadd.xlane.f32.xlu0 %v1010
    %v1012 = vpop.xlane.xlu0 %1011
    %v1013 = vadd.f32 %v1012, %v631
    %v1014 = vld [vmem:[#allocation8 + $0x4] sm:$0xf]
    %v1017 = vunpack.c.l.s4 1966171168
    %v1018 = vunpack.c.0.s8 %v1017
    %v1019 = vlaneseq
    %v1020 = vshrl.u32 %v1019, 7
    %v1021 = vsub.s32 %v1018, %v1020
    %v1022 = vrot.slane %v1014, %v1021
    %v1023 = vcombine.high %v1022, %v1022
    %v1025 = vunpack.c.l.s4 1966171168
    %v1026 = vunpack.c.0.s8 %v1025
    %v1027 = vlaneseq
    %v1028 = vshrl.u32 %v1027, 7
    %v1029 = vsub.s32 %v1026, %v1028
    %v1030 = vrot.slane %v1022, %v1029
    %v1032 = vunpack.c.l.s4 1966171168
    %v1033 = vunpack.c.0.s8 %v1032
    %v1034 = vlaneseq
    %v1035 = vshrl.u32 %v1034, 7
    %v1036 = vsub.s32 %v1033, %v1035
    %v1037 = vrot.slane %v1023, %v1036
    %v1038 = vcombine.high %v1030, %v1030
    %v1039 = vcombine.high %v1037, %v1037
    %1044 = vmatprep.subr.bf16.mxu0 0
    %1045 = vmatpush1.bf16.msra.mxu0 %v870
    %1046 = vmatprep.subr.bf16.mxu0 0
    %1047 = vmatpush1.bf16.msra.mxu0 %v869
    %1048 = vmatprep.subr.bf16.mxu0 0
    %1049 = vmatpush1.bf16.msra.mxu0 %v868
    %1050 = vmatprep.subr.bf16.mxu0 0
    %1051 = vmatpush1.bf16.msra.mxu0 %v867
    %1052 = vmatprep.subr.bf16.mxu0 0
    %1053 = vmatpush1.bf16.msra.mxu0 %v866
    %1054 = vmatprep.subr.bf16.mxu0 0
    %1055 = vmatpush1.bf16.msra.mxu0 %v865
    %1056 = vmatprep.subr.bf16.mxu0 0
    %1057 = vmatpush1.bf16.msra.mxu0 %v864
    %1058 = vmatprep.subr.bf16.mxu0 0
    %1059 = vmatpush1.bf16.msra.mxu0 %v863
    %1060 = vmatprep.subr.bf16.mxu0 0
    %1061 = vmatpush2.bf16.msra.mxu0 %v878
    %1062 = vmatprep.subr.bf16.mxu0 0
    %1063 = vmatpush2.bf16.msra.mxu0 %v877
    %1064 = vmatprep.subr.bf16.mxu0 0
    %1065 = vmatpush2.bf16.msra.mxu0 %v876
    %1066 = vmatprep.subr.bf16.mxu0 0
    %1067 = vmatpush2.bf16.msra.mxu0 %v875
    %1068 = vmatprep.subr.bf16.mxu0 0
    %1069 = vmatpush2.bf16.msra.mxu0 %v874
    %1070 = vmatprep.subr.bf16.mxu0 0
    %1071 = vmatpush2.bf16.msra.mxu0 %v873
    %1072 = vmatprep.subr.bf16.mxu0 0
    %1073 = vmatpush2.bf16.msra.mxu0 %v872
    %1074 = vmatprep.subr.bf16.mxu0 0
    %1075 = vmatpush2.bf16.msra.mxu0 %v871
    %1076 = vmatprep.mubr.bf16.mxu0 %v1037
    %1077 = vmatmul.mubr.bf16.gmra.mxu0 %v1030
    %v1078 = vpop.f32.mrf.mxu0
    %v1079 = vadd.f32 %v704, %v1078
    %v1080 = vpop.f32.mrf.mxu0
    %v1081 = vpop.f32.mrf.mxu0
    %v1082 = vpop.f32.mrf.mxu0
    %1083 = vdwg.mxu0
    %1084 = vmatprep.subr.bf16.mxu0 0
    %1085 = vmatpush1.bf16.msra.mxu0 %v886
    %1086 = vmatprep.subr.bf16.mxu0 0
    %1087 = vmatpush1.bf16.msra.mxu0 %v885
    %1088 = vmatprep.subr.bf16.mxu0 0
    %1089 = vmatpush1.bf16.msra.mxu0 %v884
    %1090 = vmatprep.subr.bf16.mxu0 0
    %1091 = vmatpush1.bf16.msra.mxu0 %v883
    %1092 = vmatprep.subr.bf16.mxu0 0
    %1093 = vmatpush1.bf16.msra.mxu0 %v882
    %1094 = vmatprep.subr.bf16.mxu0 0
    %1095 = vmatpush1.bf16.msra.mxu0 %v881
    %1096 = vmatprep.subr.bf16.mxu0 0
    %1097 = vmatpush1.bf16.msra.mxu0 %v880
    %1098 = vmatprep.subr.bf16.mxu0 0
    %1099 = vmatpush1.bf16.msra.mxu0 %v879
    %1100 = vmatprep.subr.bf16.mxu0 0
    %1101 = vmatpush2.bf16.msra.mxu0 %v894
    %1102 = vmatprep.subr.bf16.mxu0 0
    %1103 = vmatpush2.bf16.msra.mxu0 %v893
    %1104 = vmatprep.subr.bf16.mxu0 0
    %1105 = vmatpush2.bf16.msra.mxu0 %v892
    %1106 = vmatprep.subr.bf16.mxu0 0
    %1107 = vmatpush2.bf16.msra.mxu0 %v891
    %1108 = vmatprep.subr.bf16.mxu0 0
    %1109 = vmatpush2.bf16.msra.mxu0 %v890
    %1110 = vmatprep.subr.bf16.mxu0 0
    %1111 = vmatpush2.bf16.msra.mxu0 %v889
    %1112 = vmatprep.subr.bf16.mxu0 0
    %1113 = vmatpush2.bf16.msra.mxu0 %v888
    %1114 = vmatprep.subr.bf16.mxu0 0
    %1115 = vmatpush2.bf16.msra.mxu0 %v887
    %1116 = vmatprep.mubr.bf16.mxu0 %v1039
    %1117 = vmatmul.mubr.bf16.gmra.mxu0 %v1038
    %v1118 = vpop.f32.mrf.mxu0
    %v1119 = vadd.f32 %v1079, %v1118
    %v1120 = vpop.f32.mrf.mxu0
    %v1121 = vpop.f32.mrf.mxu0
    %v1122 = vpop.f32.mrf.mxu0
    %1123 = vdwg.mxu0
    %v1124 = vadd.f32 %v1119, %v609
    %v1125 = vtanh.pop %v1124
    %v1126 = vmul.f32 %v1125, %v620
    %v1127 = vsel %vm623, %v1126, 0.0
    %1128 = vadd.xlane.f32.xlu0 %v1127
    %v1129 = vpop.xlane.xlu0 %1128
    %v1130 = vadd.f32 %v1129, %v631
    %v1131 = vld [vmem:[#allocation8 + $0x8] sm:$0xf]
    %v1134 = vunpack.c.l.s4 1966171168
    %v1135 = vunpack.c.0.s8 %v1134
    %v1136 = vlaneseq
    %v1137 = vshrl.u32 %v1136, 7
    %v1138 = vsub.s32 %v1135, %v1137
    %v1139 = vrot.slane %v1131, %v1138
    %v1140 = vcombine.high %v1139, %v1139
    %v1142 = vunpack.c.l.s4 1966171168
    %v1143 = vunpack.c.0.s8 %v1142
    %v1144 = vlaneseq
    %v1145 = vshrl.u32 %v1144, 7
    %v1146 = vsub.s32 %v1143, %v1145
    %v1147 = vrot.slane %v1139, %v1146
    %v1149 = vunpack.c.l.s4 1966171168
    %v1150 = vunpack.c.0.s8 %v1149
    %v1151 = vlaneseq
    %v1152 = vshrl.u32 %v1151, 7
    %v1153 = vsub.s32 %v1150, %v1152
    %v1154 = vrot.slane %v1140, %v1153
    %v1155 = vcombine.high %v1147, %v1147
    %v1156 = vcombine.high %v1154, %v1154
    %1161 = vmatprep.subr.bf16.mxu0 0
    %1162 = vmatpush1.bf16.msra.mxu0 %v870
    %1163 = vmatprep.subr.bf16.mxu0 0
    %1164 = vmatpush1.bf16.msra.mxu0 %v869
    %1165 = vmatprep.subr.bf16.mxu0 0
    %1166 = vmatpush1.bf16.msra.mxu0 %v868
    %1167 = vmatprep.subr.bf16.mxu0 0
    %1168 = vmatpush1.bf16.msra.mxu0 %v867
    %1169 = vmatprep.subr.bf16.mxu0 0
    %1170 = vmatpush1.bf16.msra.mxu0 %v866
    %1171 = vmatprep.subr.bf16.mxu0 0
    %1172 = vmatpush1.bf16.msra.mxu0 %v865
    %1173 = vmatprep.subr.bf16.mxu0 0
    %1174 = vmatpush1.bf16.msra.mxu0 %v864
    %1175 = vmatprep.subr.bf16.mxu0 0
    %1176 = vmatpush1.bf16.msra.mxu0 %v863
    %1177 = vmatprep.subr.bf16.mxu0 0
    %1178 = vmatpush2.bf16.msra.mxu0 %v878
    %1179 = vmatprep.subr.bf16.mxu0 0
    %1180 = vmatpush2.bf16.msra.mxu0 %v877
    %1181 = vmatprep.subr.bf16.mxu0 0
    %1182 = vmatpush2.bf16.msra.mxu0 %v876
    %1183 = vmatprep.subr.bf16.mxu0 0
    %1184 = vmatpush2.bf16.msra.mxu0 %v875
    %1185 = vmatprep.subr.bf16.mxu0 0
    %1186 = vmatpush2.bf16.msra.mxu0 %v874
    %1187 = vmatprep.subr.bf16.mxu0 0
    %1188 = vmatpush2.bf16.msra.mxu0 %v873
    %1189 = vmatprep.subr.bf16.mxu0 0
    %1190 = vmatpush2.bf16.msra.mxu0 %v872
    %1191 = vmatprep.subr.bf16.mxu0 0
    %1192 = vmatpush2.bf16.msra.mxu0 %v871
    %1193 = vmatprep.mubr.bf16.mxu0 %v1154
    %1194 = vmatmul.mubr.bf16.gmra.mxu0 %v1147
    %v1195 = vpop.f32.mrf.mxu0
    %v1196 = vadd.f32 %v704, %v1195
    %v1197 = vpop.f32.mrf.mxu0
    %v1198 = vpop.f32.mrf.mxu0
    %v1199 = vpop.f32.mrf.mxu0
    %1200 = vdwg.mxu0
    %1201 = vmatprep.subr.bf16.mxu0 0
    %1202 = vmatpush1.bf16.msra.mxu0 %v886
    %1203 = vmatprep.subr.bf16.mxu0 0
    %1204 = vmatpush1.bf16.msra.mxu0 %v885
    %1205 = vmatprep.subr.bf16.mxu0 0
    %1206 = vmatpush1.bf16.msra.mxu0 %v884
    %1207 = vmatprep.subr.bf16.mxu0 0
    %1208 = vmatpush1.bf16.msra.mxu0 %v883
    %1209 = vmatprep.subr.bf16.mxu0 0
    %1210 = vmatpush1.bf16.msra.mxu0 %v882
    %1211 = vmatprep.subr.bf16.mxu0 0
    %1212 = vmatpush1.bf16.msra.mxu0 %v881
    %1213 = vmatprep.subr.bf16.mxu0 0
    %1214 = vmatpush1.bf16.msra.mxu0 %v880
    %1215 = vmatprep.subr.bf16.mxu0 0
    %1216 = vmatpush1.bf16.msra.mxu0 %v879
    %1217 = vmatprep.subr.bf16.mxu0 0
    %1218 = vmatpush2.bf16.msra.mxu0 %v894
    %1219 = vmatprep.subr.bf16.mxu0 0
    %1220 = vmatpush2.bf16.msra.mxu0 %v893
    %1221 = vmatprep.subr.bf16.mxu0 0
    %1222 = vmatpush2.bf16.msra.mxu0 %v892
    %1223 = vmatprep.subr.bf16.mxu0 0
    %1224 = vmatpush2.bf16.msra.mxu0 %v891
    %1225 = vmatprep.subr.bf16.mxu0 0
    %1226 = vmatpush2.bf16.msra.mxu0 %v890
    %1227 = vmatprep.subr.bf16.mxu0 0
    %1228 = vmatpush2.bf16.msra.mxu0 %v889
    %1229 = vmatprep.subr.bf16.mxu0 0
    %1230 = vmatpush2.bf16.msra.mxu0 %v888
    %1231 = vmatprep.subr.bf16.mxu0 0
    %1232 = vmatpush2.bf16.msra.mxu0 %v887
    %1233 = vmatprep.mubr.bf16.mxu0 %v1156
    %1234 = vmatmul.mubr.bf16.gmra.mxu0 %v1155
    %v1235 = vpop.f32.mrf.mxu0
    %v1236 = vadd.f32 %v1196, %v1235
    %v1237 = vpop.f32.mrf.mxu0
    %v1238 = vpop.f32.mrf.mxu0
    %v1239 = vpop.f32.mrf.mxu0
    %1240 = vdwg.mxu0
    %v1241 = vadd.f32 %v1236, %v609
    %v1242 = vtanh.pop %v1241
    %v1243 = vmul.f32 %v1242, %v620
    %v1244 = vsel %vm623, %v1243, 0.0
    %1245 = vadd.xlane.f32.xlu0 %v1244
    %v1246 = vpop.xlane.xlu0 %1245
    %v1247 = vadd.f32 %v1246, %v631
    %v1248 = vld [vmem:[#allocation8 + $0xc] sm:$0xf]
    %v1251 = vunpack.c.l.s4 1966171168
    %v1252 = vunpack.c.0.s8 %v1251
    %v1253 = vlaneseq
    %v1254 = vshrl.u32 %v1253, 7
    %v1255 = vsub.s32 %v1252, %v1254
    %v1256 = vrot.slane %v1248, %v1255
    %v1257 = vcombine.high %v1256, %v1256
    %v1259 = vunpack.c.l.s4 1966171168
    %v1260 = vunpack.c.0.s8 %v1259
    %v1261 = vlaneseq
    %v1262 = vshrl.u32 %v1261, 7
    %v1263 = vsub.s32 %v1260, %v1262
    %v1264 = vrot.slane %v1256, %v1263
    %v1266 = vunpack.c.l.s4 1966171168
    %v1267 = vunpack.c.0.s8 %v1266
    %v1268 = vlaneseq
    %v1269 = vshrl.u32 %v1268, 7
    %v1270 = vsub.s32 %v1267, %v1269
    %v1271 = vrot.slane %v1257, %v1270
    %v1272 = vcombine.high %v1264, %v1264
    %v1273 = vcombine.high %v1271, %v1271
    %1278 = vmatprep.subr.bf16.mxu0 0
    %1279 = vmatpush1.bf16.msra.mxu0 %v870
    %1280 = vmatprep.subr.bf16.mxu0 0
    %1281 = vmatpush1.bf16.msra.mxu0 %v869
    %1282 = vmatprep.subr.bf16.mxu0 0
    %1283 = vmatpush1.bf16.msra.mxu0 %v868
    %1284 = vmatprep.subr.bf16.mxu0 0
    %1285 = vmatpush1.bf16.msra.mxu0 %v867
    %1286 = vmatprep.subr.bf16.mxu0 0
    %1287 = vmatpush1.bf16.msra.mxu0 %v866
    %1288 = vmatprep.subr.bf16.mxu0 0
    %1289 = vmatpush1.bf16.msra.mxu0 %v865
    %1290 = vmatprep.subr.bf16.mxu0 0
    %1291 = vmatpush1.bf16.msra.mxu0 %v864
    %1292 = vmatprep.subr.bf16.mxu0 0
    %1293 = vmatpush1.bf16.msra.mxu0 %v863
    %1294 = vmatprep.subr.bf16.mxu0 0
    %1295 = vmatpush2.bf16.msra.mxu0 %v878
    %1296 = vmatprep.subr.bf16.mxu0 0
    %1297 = vmatpush2.bf16.msra.mxu0 %v877
    %1298 = vmatprep.subr.bf16.mxu0 0
    %1299 = vmatpush2.bf16.msra.mxu0 %v876
    %1300 = vmatprep.subr.bf16.mxu0 0
    %1301 = vmatpush2.bf16.msra.mxu0 %v875
    %1302 = vmatprep.subr.bf16.mxu0 0
    %1303 = vmatpush2.bf16.msra.mxu0 %v874
    %1304 = vmatprep.subr.bf16.mxu0 0
    %1305 = vmatpush2.bf16.msra.mxu0 %v873
    %1306 = vmatprep.subr.bf16.mxu0 0
    %1307 = vmatpush2.bf16.msra.mxu0 %v872
    %1308 = vmatprep.subr.bf16.mxu0 0
    %1309 = vmatpush2.bf16.msra.mxu0 %v871
    %1310 = vmatprep.mubr.bf16.mxu0 %v1271
    %1311 = vmatmul.mubr.bf16.gmra.mxu0 %v1264
    %v1312 = vpop.f32.mrf.mxu0
    %v1313 = vadd.f32 %v704, %v1312
    %v1314 = vpop.f32.mrf.mxu0
    %v1315 = vpop.f32.mrf.mxu0
    %v1316 = vpop.f32.mrf.mxu0
    %1317 = vdwg.mxu0
    %1318 = vmatprep.subr.bf16.mxu0 0
    %1319 = vmatpush1.bf16.msra.mxu0 %v886
    %1320 = vmatprep.subr.bf16.mxu0 0
    %1321 = vmatpush1.bf16.msra.mxu0 %v885
    %1322 = vmatprep.subr.bf16.mxu0 0
    %1323 = vmatpush1.bf16.msra.mxu0 %v884
    %1324 = vmatprep.subr.bf16.mxu0 0
    %1325 = vmatpush1.bf16.msra.mxu0 %v883
    %1326 = vmatprep.subr.bf16.mxu0 0
    %1327 = vmatpush1.bf16.msra.mxu0 %v882
    %1328 = vmatprep.subr.bf16.mxu0 0
    %1329 = vmatpush1.bf16.msra.mxu0 %v881
    %1330 = vmatprep.subr.bf16.mxu0 0
    %1331 = vmatpush1.bf16.msra.mxu0 %v880
    %1332 = vmatprep.subr.bf16.mxu0 0
    %1333 = vmatpush1.bf16.msra.mxu0 %v879
    %1334 = vmatprep.subr.bf16.mxu0 0
    %1335 = vmatpush2.bf16.msra.mxu0 %v894
    %1336 = vmatprep.subr.bf16.mxu0 0
    %1337 = vmatpush2.bf16.msra.mxu0 %v893
    %1338 = vmatprep.subr.bf16.mxu0 0
    %1339 = vmatpush2.bf16.msra.mxu0 %v892
    %1340 = vmatprep.subr.bf16.mxu0 0
    %1341 = vmatpush2.bf16.msra.mxu0 %v891
    %1342 = vmatprep.subr.bf16.mxu0 0
    %1343 = vmatpush2.bf16.msra.mxu0 %v890
    %1344 = vmatprep.subr.bf16.mxu0 0
    %1345 = vmatpush2.bf16.msra.mxu0 %v889
    %1346 = vmatprep.subr.bf16.mxu0 0
    %1347 = vmatpush2.bf16.msra.mxu0 %v888
    %1348 = vmatprep.subr.bf16.mxu0 0
    %1349 = vmatpush2.bf16.msra.mxu0 %v887
    %1350 = vmatprep.mubr.bf16.mxu0 %v1273
    %1351 = vmatmul.mubr.bf16.gmra.mxu0 %v1272
    %v1352 = vpop.f32.mrf.mxu0
    %v1353 = vadd.f32 %v1313, %v1352
    %v1354 = vpop.f32.mrf.mxu0
    %v1355 = vpop.f32.mrf.mxu0
    %v1356 = vpop.f32.mrf.mxu0
    %1357 = vdwg.mxu0
    %v1358 = vadd.f32 %v1353, %v609
    %v1359 = vtanh.pop %v1358
    %v1360 = vmul.f32 %v1359, %v620
    %v1361 = vsel %vm623, %v1360, 0.0
    %1362 = vadd.xlane.f32.xlu0 %v1361
    %v1363 = vpop.xlane.xlu0 %1362
    %v1364 = vadd.f32 %v1363, %v631
    %v1365 = vld [vmem:[#allocation8 + $0x10] sm:$0xf]
    %v1368 = vunpack.c.l.s4 1966171168
    %v1369 = vunpack.c.0.s8 %v1368
    %v1370 = vlaneseq
    %v1371 = vshrl.u32 %v1370, 7
    %v1372 = vsub.s32 %v1369, %v1371
    %v1373 = vrot.slane %v1365, %v1372
    %v1374 = vcombine.high %v1373, %v1373
    %v1376 = vunpack.c.l.s4 1966171168
    %v1377 = vunpack.c.0.s8 %v1376
    %v1378 = vlaneseq
    %v1379 = vshrl.u32 %v1378, 7
    %v1380 = vsub.s32 %v1377, %v1379
    %v1381 = vrot.slane %v1373, %v1380
    %v1383 = vunpack.c.l.s4 1966171168
    %v1384 = vunpack.c.0.s8 %v1383
    %v1385 = vlaneseq
    %v1386 = vshrl.u32 %v1385, 7
    %v1387 = vsub.s32 %v1384, %v1386
    %v1388 = vrot.slane %v1374, %v1387
    %v1389 = vcombine.high %v1381, %v1381
    %v1390 = vcombine.high %v1388, %v1388
    %1395 = vmatprep.subr.bf16.mxu0 0
    %1396 = vmatpush1.bf16.msra.mxu0 %v870
    %1397 = vmatprep.subr.bf16.mxu0 0
    %1398 = vmatpush1.bf16.msra.mxu0 %v869
    %1399 = vmatprep.subr.bf16.mxu0 0
    %1400 = vmatpush1.bf16.msra.mxu0 %v868
    %1401 = vmatprep.subr.bf16.mxu0 0
    %1402 = vmatpush1.bf16.msra.mxu0 %v867
    %1403 = vmatprep.subr.bf16.mxu0 0
    %1404 = vmatpush1.bf16.msra.mxu0 %v866
    %1405 = vmatprep.subr.bf16.mxu0 0
    %1406 = vmatpush1.bf16.msra.mxu0 %v865
    %1407 = vmatprep.subr.bf16.mxu0 0
    %1408 = vmatpush1.bf16.msra.mxu0 %v864
    %1409 = vmatprep.subr.bf16.mxu0 0
    %1410 = vmatpush1.bf16.msra.mxu0 %v863
    %1411 = vmatprep.subr.bf16.mxu0 0
    %1412 = vmatpush2.bf16.msra.mxu0 %v878
    %1413 = vmatprep.subr.bf16.mxu0 0
    %1414 = vmatpush2.bf16.msra.mxu0 %v877
    %1415 = vmatprep.subr.bf16.mxu0 0
    %1416 = vmatpush2.bf16.msra.mxu0 %v876
    %1417 = vmatprep.subr.bf16.mxu0 0
    %1418 = vmatpush2.bf16.msra.mxu0 %v875
    %1419 = vmatprep.subr.bf16.mxu0 0
    %1420 = vmatpush2.bf16.msra.mxu0 %v874
    %1421 = vmatprep.subr.bf16.mxu0 0
    %1422 = vmatpush2.bf16.msra.mxu0 %v873
    %1423 = vmatprep.subr.bf16.mxu0 0
    %1424 = vmatpush2.bf16.msra.mxu0 %v872
    %1425 = vmatprep.subr.bf16.mxu0 0
    %1426 = vmatpush2.bf16.msra.mxu0 %v871
    %1427 = vmatprep.mubr.bf16.mxu0 %v1388
    %1428 = vmatmul.mubr.bf16.gmra.mxu0 %v1381
    %v1429 = vpop.f32.mrf.mxu0
    %v1430 = vadd.f32 %v704, %v1429
    %v1431 = vpop.f32.mrf.mxu0
    %v1432 = vpop.f32.mrf.mxu0
    %v1433 = vpop.f32.mrf.mxu0
    %1434 = vdwg.mxu0
    %1435 = vmatprep.subr.bf16.mxu0 0
    %1436 = vmatpush1.bf16.msra.mxu0 %v886
    %1437 = vmatprep.subr.bf16.mxu0 0
    %1438 = vmatpush1.bf16.msra.mxu0 %v885
    %1439 = vmatprep.subr.bf16.mxu0 0
    %1440 = vmatpush1.bf16.msra.mxu0 %v884
    %1441 = vmatprep.subr.bf16.mxu0 0
    %1442 = vmatpush1.bf16.msra.mxu0 %v883
    %1443 = vmatprep.subr.bf16.mxu0 0
    %1444 = vmatpush1.bf16.msra.mxu0 %v882
    %1445 = vmatprep.subr.bf16.mxu0 0
    %1446 = vmatpush1.bf16.msra.mxu0 %v881
    %1447 = vmatprep.subr.bf16.mxu0 0
    %1448 = vmatpush1.bf16.msra.mxu0 %v880
    %1449 = vmatprep.subr.bf16.mxu0 0
    %1450 = vmatpush1.bf16.msra.mxu0 %v879
    %1451 = vmatprep.subr.bf16.mxu0 0
    %1452 = vmatpush2.bf16.msra.mxu0 %v894
    %1453 = vmatprep.subr.bf16.mxu0 0
    %1454 = vmatpush2.bf16.msra.mxu0 %v893
    %1455 = vmatprep.subr.bf16.mxu0 0
    %1456 = vmatpush2.bf16.msra.mxu0 %v892
    %1457 = vmatprep.subr.bf16.mxu0 0
    %1458 = vmatpush2.bf16.msra.mxu0 %v891
    %1459 = vmatprep.subr.bf16.mxu0 0
    %1460 = vmatpush2.bf16.msra.mxu0 %v890
    %1461 = vmatprep.subr.bf16.mxu0 0
    %1462 = vmatpush2.bf16.msra.mxu0 %v889
    %1463 = vmatprep.subr.bf16.mxu0 0
    %1464 = vmatpush2.bf16.msra.mxu0 %v888
    %1465 = vmatprep.subr.bf16.mxu0 0
    %1466 = vmatpush2.bf16.msra.mxu0 %v887
    %1467 = vmatprep.mubr.bf16.mxu0 %v1390
    %1468 = vmatmul.mubr.bf16.gmra.mxu0 %v1389
    %v1469 = vpop.f32.mrf.mxu0
    %v1470 = vadd.f32 %v1430, %v1469
    %v1471 = vpop.f32.mrf.mxu0
    %v1472 = vpop.f32.mrf.mxu0
    %v1473 = vpop.f32.mrf.mxu0
    %1474 = vdwg.mxu0
    %v1475 = vadd.f32 %v1470, %v609
    %v1476 = vtanh.pop %v1475
    %v1477 = vmul.f32 %v1476, %v620
    %v1478 = vsel %vm623, %v1477, 0.0
    %1479 = vadd.xlane.f32.xlu0 %v1478
    %v1480 = vpop.xlane.xlu0 %1479
    %v1481 = vadd.f32 %v1480, %v631
    %v1482 = vld [vmem:[#allocation8 + $0x14] sm:$0xf]
    %v1485 = vunpack.c.l.s4 1966171168
    %v1486 = vunpack.c.0.s8 %v1485
    %v1487 = vlaneseq
    %v1488 = vshrl.u32 %v1487, 7
    %v1489 = vsub.s32 %v1486, %v1488
    %v1490 = vrot.slane %v1482, %v1489
    %v1491 = vcombine.high %v1490, %v1490
    %v1493 = vunpack.c.l.s4 1966171168
    %v1494 = vunpack.c.0.s8 %v1493
    %v1495 = vlaneseq
    %v1496 = vshrl.u32 %v1495, 7
    %v1497 = vsub.s32 %v1494, %v1496
    %v1498 = vrot.slane %v1490, %v1497
    %v1500 = vunpack.c.l.s4 1966171168
    %v1501 = vunpack.c.0.s8 %v1500
    %v1502 = vlaneseq
    %v1503 = vshrl.u32 %v1502, 7
    %v1504 = vsub.s32 %v1501, %v1503
    %v1505 = vrot.slane %v1491, %v1504
    %v1506 = vcombine.high %v1498, %v1498
    %v1507 = vcombine.high %v1505, %v1505
    %1512 = vmatprep.subr.bf16.mxu0 0
    %1513 = vmatpush1.bf16.msra.mxu0 %v870
    %1514 = vmatprep.subr.bf16.mxu0 0
    %1515 = vmatpush1.bf16.msra.mxu0 %v869
    %1516 = vmatprep.subr.bf16.mxu0 0
    %1517 = vmatpush1.bf16.msra.mxu0 %v868
    %1518 = vmatprep.subr.bf16.mxu0 0
    %1519 = vmatpush1.bf16.msra.mxu0 %v867
    %1520 = vmatprep.subr.bf16.mxu0 0
    %1521 = vmatpush1.bf16.msra.mxu0 %v866
    %1522 = vmatprep.subr.bf16.mxu0 0
    %1523 = vmatpush1.bf16.msra.mxu0 %v865
    %1524 = vmatprep.subr.bf16.mxu0 0
    %1525 = vmatpush1.bf16.msra.mxu0 %v864
    %1526 = vmatprep.subr.bf16.mxu0 0
    %1527 = vmatpush1.bf16.msra.mxu0 %v863
    %1528 = vmatprep.subr.bf16.mxu0 0
    %1529 = vmatpush2.bf16.msra.mxu0 %v878
    %1530 = vmatprep.subr.bf16.mxu0 0
    %1531 = vmatpush2.bf16.msra.mxu0 %v877
    %1532 = vmatprep.subr.bf16.mxu0 0
    %1533 = vmatpush2.bf16.msra.mxu0 %v876
    %1534 = vmatprep.subr.bf16.mxu0 0
    %1535 = vmatpush2.bf16.msra.mxu0 %v875
    %1536 = vmatprep.subr.bf16.mxu0 0
    %1537 = vmatpush2.bf16.msra.mxu0 %v874
    %1538 = vmatprep.subr.bf16.mxu0 0
    %1539 = vmatpush2.bf16.msra.mxu0 %v873
    %1540 = vmatprep.subr.bf16.mxu0 0
    %1541 = vmatpush2.bf16.msra.mxu0 %v872
    %1542 = vmatprep.subr.bf16.mxu0 0
    %1543 = vmatpush2.bf16.msra.mxu0 %v871
    %1544 = vmatprep.mubr.bf16.mxu0 %v1505
    %1545 = vmatmul.mubr.bf16.gmra.mxu0 %v1498
    %v1546 = vpop.f32.mrf.mxu0
    %v1547 = vadd.f32 %v704, %v1546
    %v1548 = vpop.f32.mrf.mxu0
    %v1549 = vpop.f32.mrf.mxu0
    %v1550 = vpop.f32.mrf.mxu0
    %1551 = vdwg.mxu0
    %1552 = vmatprep.subr.bf16.mxu0 0
    %1553 = vmatpush1.bf16.msra.mxu0 %v886
    %1554 = vmatprep.subr.bf16.mxu0 0
    %1555 = vmatpush1.bf16.msra.mxu0 %v885
    %1556 = vmatprep.subr.bf16.mxu0 0
    %1557 = vmatpush1.bf16.msra.mxu0 %v884
    %1558 = vmatprep.subr.bf16.mxu0 0
    %1559 = vmatpush1.bf16.msra.mxu0 %v883
    %1560 = vmatprep.subr.bf16.mxu0 0
    %1561 = vmatpush1.bf16.msra.mxu0 %v882
    %1562 = vmatprep.subr.bf16.mxu0 0
    %1563 = vmatpush1.bf16.msra.mxu0 %v881
    %1564 = vmatprep.subr.bf16.mxu0 0
    %1565 = vmatpush1.bf16.msra.mxu0 %v880
    %1566 = vmatprep.subr.bf16.mxu0 0
    %1567 = vmatpush1.bf16.msra.mxu0 %v879
    %1568 = vmatprep.subr.bf16.mxu0 0
    %1569 = vmatpush2.bf16.msra.mxu0 %v894
    %1570 = vmatprep.subr.bf16.mxu0 0
    %1571 = vmatpush2.bf16.msra.mxu0 %v893
    %1572 = vmatprep.subr.bf16.mxu0 0
    %1573 = vmatpush2.bf16.msra.mxu0 %v892
    %1574 = vmatprep.subr.bf16.mxu0 0
    %1575 = vmatpush2.bf16.msra.mxu0 %v891
    %1576 = vmatprep.subr.bf16.mxu0 0
    %1577 = vmatpush2.bf16.msra.mxu0 %v890
    %1578 = vmatprep.subr.bf16.mxu0 0
    %1579 = vmatpush2.bf16.msra.mxu0 %v889
    %1580 = vmatprep.subr.bf16.mxu0 0
    %1581 = vmatpush2.bf16.msra.mxu0 %v888
    %1582 = vmatprep.subr.bf16.mxu0 0
    %1583 = vmatpush2.bf16.msra.mxu0 %v887
    %1584 = vmatprep.mubr.bf16.mxu0 %v1507
    %1585 = vmatmul.mubr.bf16.gmra.mxu0 %v1506
    %v1586 = vpop.f32.mrf.mxu0
    %v1587 = vadd.f32 %v1547, %v1586
    %v1588 = vpop.f32.mrf.mxu0
    %v1589 = vpop.f32.mrf.mxu0
    %v1590 = vpop.f32.mrf.mxu0
    %1591 = vdwg.mxu0
    %v1592 = vadd.f32 %v1587, %v609
    %v1593 = vtanh.pop %v1592
    %v1594 = vmul.f32 %v1593, %v620
    %v1595 = vsel %vm623, %v1594, 0.0
    %1596 = vadd.xlane.f32.xlu0 %v1595
    %v1597 = vpop.xlane.xlu0 %1596
    %v1598 = vadd.f32 %v1597, %v631
    %v1599 = vld [vmem:[#allocation8 + $0x18] sm:$0xf]
    %v1602 = vunpack.c.l.s4 1966171168
    %v1603 = vunpack.c.0.s8 %v1602
    %v1604 = vlaneseq
    %v1605 = vshrl.u32 %v1604, 7
    %v1606 = vsub.s32 %v1603, %v1605
    %v1607 = vrot.slane %v1599, %v1606
    %v1608 = vcombine.high %v1607, %v1607
    %v1610 = vunpack.c.l.s4 1966171168
    %v1611 = vunpack.c.0.s8 %v1610
    %v1612 = vlaneseq
    %v1613 = vshrl.u32 %v1612, 7
    %v1614 = vsub.s32 %v1611, %v1613
    %v1615 = vrot.slane %v1607, %v1614
    %v1617 = vunpack.c.l.s4 1966171168
    %v1618 = vunpack.c.0.s8 %v1617
    %v1619 = vlaneseq
    %v1620 = vshrl.u32 %v1619, 7
    %v1621 = vsub.s32 %v1618, %v1620
    %v1622 = vrot.slane %v1608, %v1621
    %v1623 = vcombine.high %v1615, %v1615
    %v1624 = vcombine.high %v1622, %v1622
    %1629 = vmatprep.subr.bf16.mxu0 0
    %1630 = vmatpush1.bf16.msra.mxu0 %v870
    %1631 = vmatprep.subr.bf16.mxu0 0
    %1632 = vmatpush1.bf16.msra.mxu0 %v869
    %1633 = vmatprep.subr.bf16.mxu0 0
    %1634 = vmatpush1.bf16.msra.mxu0 %v868
    %1635 = vmatprep.subr.bf16.mxu0 0
    %1636 = vmatpush1.bf16.msra.mxu0 %v867
    %1637 = vmatprep.subr.bf16.mxu0 0
    %1638 = vmatpush1.bf16.msra.mxu0 %v866
    %1639 = vmatprep.subr.bf16.mxu0 0
    %1640 = vmatpush1.bf16.msra.mxu0 %v865
    %1641 = vmatprep.subr.bf16.mxu0 0
    %1642 = vmatpush1.bf16.msra.mxu0 %v864
    %1643 = vmatprep.subr.bf16.mxu0 0
    %1644 = vmatpush1.bf16.msra.mxu0 %v863
    %1645 = vmatprep.subr.bf16.mxu0 0
    %1646 = vmatpush2.bf16.msra.mxu0 %v878
    %1647 = vmatprep.subr.bf16.mxu0 0
    %1648 = vmatpush2.bf16.msra.mxu0 %v877
    %1649 = vmatprep.subr.bf16.mxu0 0
    %1650 = vmatpush2.bf16.msra.mxu0 %v876
    %1651 = vmatprep.subr.bf16.mxu0 0
    %1652 = vmatpush2.bf16.msra.mxu0 %v875
    %1653 = vmatprep.subr.bf16.mxu0 0
    %1654 = vmatpush2.bf16.msra.mxu0 %v874
    %1655 = vmatprep.subr.bf16.mxu0 0
    %1656 = vmatpush2.bf16.msra.mxu0 %v873
    %1657 = vmatprep.subr.bf16.mxu0 0
    %1658 = vmatpush2.bf16.msra.mxu0 %v872
    %1659 = vmatprep.subr.bf16.mxu0 0
    %1660 = vmatpush2.bf16.msra.mxu0 %v871
    %1661 = vmatprep.mubr.bf16.mxu0 %v1622
    %1662 = vmatmul.mubr.bf16.gmra.mxu0 %v1615
    %v1663 = vpop.f32.mrf.mxu0
    %v1664 = vadd.f32 %v704, %v1663
    %v1665 = vpop.f32.mrf.mxu0
    %v1666 = vpop.f32.mrf.mxu0
    %v1667 = vpop.f32.mrf.mxu0
    %1668 = vdwg.mxu0
    %1669 = vmatprep.subr.bf16.mxu0 0
    %1670 = vmatpush1.bf16.msra.mxu0 %v886
    %1671 = vmatprep.subr.bf16.mxu0 0
    %1672 = vmatpush1.bf16.msra.mxu0 %v885
    %1673 = vmatprep.subr.bf16.mxu0 0
    %1674 = vmatpush1.bf16.msra.mxu0 %v884
    %1675 = vmatprep.subr.bf16.mxu0 0
    %1676 = vmatpush1.bf16.msra.mxu0 %v883
    %1677 = vmatprep.subr.bf16.mxu0 0
    %1678 = vmatpush1.bf16.msra.mxu0 %v882
    %1679 = vmatprep.subr.bf16.mxu0 0
    %1680 = vmatpush1.bf16.msra.mxu0 %v881
    %1681 = vmatprep.subr.bf16.mxu0 0
    %1682 = vmatpush1.bf16.msra.mxu0 %v880
    %1683 = vmatprep.subr.bf16.mxu0 0
    %1684 = vmatpush1.bf16.msra.mxu0 %v879
    %1685 = vmatprep.subr.bf16.mxu0 0
    %1686 = vmatpush2.bf16.msra.mxu0 %v894
    %1687 = vmatprep.subr.bf16.mxu0 0
    %1688 = vmatpush2.bf16.msra.mxu0 %v893
    %1689 = vmatprep.subr.bf16.mxu0 0
    %1690 = vmatpush2.bf16.msra.mxu0 %v892
    %1691 = vmatprep.subr.bf16.mxu0 0
    %1692 = vmatpush2.bf16.msra.mxu0 %v891
    %1693 = vmatprep.subr.bf16.mxu0 0
    %1694 = vmatpush2.bf16.msra.mxu0 %v890
    %1695 = vmatprep.subr.bf16.mxu0 0
    %1696 = vmatpush2.bf16.msra.mxu0 %v889
    %1697 = vmatprep.subr.bf16.mxu0 0
    %1698 = vmatpush2.bf16.msra.mxu0 %v888
    %1699 = vmatprep.subr.bf16.mxu0 0
    %1700 = vmatpush2.bf16.msra.mxu0 %v887
    %1701 = vmatprep.mubr.bf16.mxu0 %v1624
    %1702 = vmatmul.mubr.bf16.gmra.mxu0 %v1623
    %v1703 = vpop.f32.mrf.mxu0
    %v1704 = vadd.f32 %v1664, %v1703
    %v1705 = vpop.f32.mrf.mxu0
    %v1706 = vpop.f32.mrf.mxu0
    %v1707 = vpop.f32.mrf.mxu0
    %1708 = vdwg.mxu0
    %v1709 = vadd.f32 %v1704, %v609
    %v1710 = vtanh.pop %v1709
    %v1711 = vmul.f32 %v1710, %v620
    %v1712 = vsel %vm623, %v1711, 0.0
    %1713 = vadd.xlane.f32.xlu0 %v1712
    %v1714 = vpop.xlane.xlu0 %1713
    %v1715 = vadd.f32 %v1714, %v631
    %v1716 = vmax.f32 %v633, %v1013
    %v1717 = vmax.f32 %v1716, %v1130
    %v1718 = vmax.f32 %v1717, %v1247
    %v1719 = vmax.f32 %v1718, %v1364
    %v1720 = vmax.f32 %v1719, %v1481
    %v1721 = vmax.f32 %v1720, %v1598
    %v1722 = vmax.f32 %v1721, %v1715
    %v1723 = vsub.f32 %v633, %v1722
    %v1724 = vmul.f32 %v1723, 1.442695
    %v1725 = vpow.pop %v1724
    %v1726 = vsub.f32 %v1013, %v1722
    %v1727 = vmul.f32 %v1726, 1.442695
    %v1728 = vpow.pop %v1727
    %v1729 = vsub.f32 %v1130, %v1722
    %v1730 = vmul.f32 %v1729, 1.442695
    %v1731 = vpow.pop %v1730
    %v1732 = vsub.f32 %v1247, %v1722
    %v1733 = vmul.f32 %v1732, 1.442695
    %v1734 = vpow.pop %v1733
    %v1735 = vsub.f32 %v1364, %v1722
    %v1736 = vmul.f32 %v1735, 1.442695
    %v1737 = vpow.pop %v1736
    %v1738 = vsub.f32 %v1481, %v1722
    %v1739 = vmul.f32 %v1738, 1.442695
    %v1740 = vpow.pop %v1739
    %v1741 = vsub.f32 %v1598, %v1722
    %v1742 = vmul.f32 %v1741, 1.442695
    %v1743 = vpow.pop %v1742
    %v1744 = vsub.f32 %v1715, %v1722
    %v1745 = vmul.f32 %v1744, 1.442695
    %v1746 = vpow.pop %v1745
    %v1747 = vadd.f32 %v1725, %v1728
    %v1748 = vadd.f32 %v1747, %v1731
    %v1749 = vadd.f32 %v1748, %v1734
    %v1750 = vadd.f32 %v1749, %v1737
    %v1751 = vadd.f32 %v1750, %v1740
    %v1752 = vadd.f32 %v1751, %v1743
    %v1753 = vadd.f32 %v1752, %v1746
    %v1754 = vrcp.pop %v1753
    %v1755 = vmul.f32 %v1725, %v1754
    %1757 = vset.pattern.permute.xlu0 0
    %1758 = vperm.xlu0 %1757, %v1755
    %v1759 = vpop.permute.xlu0 %1758
    %v1761 = vmul.f32 %v1759, %v276
    %v1762 = vld [vmem:[#allocation6] sm:$0x3]
    %v1763 = vmul.f32 %v1728, %v1754
    %1765 = vset.pattern.permute.xlu0 0
    %1766 = vperm.xlu0 %1765, %v1763
    %v1767 = vpop.permute.xlu0 %1766
    %v1769 = vmul.f32 %v1767, %v1762
    %v1770 = vadd.f32 %v1761, %v1769
    %v1771 = vld [vmem:[#allocation6 + $0x2] sm:$0x3]
    %v1772 = vmul.f32 %v1731, %v1754
    %1774 = vset.pattern.permute.xlu0 0
    %1775 = vperm.xlu0 %1774, %v1772
    %v1776 = vpop.permute.xlu0 %1775
    %v1778 = vmul.f32 %v1776, %v1771
    %v1779 = vadd.f32 %v1770, %v1778
    %v1780 = vld [vmem:[#allocation6 + $0x4] sm:$0x3]
    %v1781 = vmul.f32 %v1734, %v1754
    %1783 = vset.pattern.permute.xlu0 0
    %1784 = vperm.xlu0 %1783, %v1781
    %v1785 = vpop.permute.xlu0 %1784
    %v1787 = vmul.f32 %v1785, %v1780
    %v1788 = vadd.f32 %v1779, %v1787
    %v1789 = vld [vmem:[#allocation6 + $0x6] sm:$0x3]
    %v1790 = vmul.f32 %v1737, %v1754
    %1792 = vset.pattern.permute.xlu0 0
    %1793 = vperm.xlu0 %1792, %v1790
    %v1794 = vpop.permute.xlu0 %1793
    %v1796 = vmul.f32 %v1794, %v1789
    %v1797 = vadd.f32 %v1788, %v1796
    %v1798 = vld [vmem:[#allocation6 + $0x8] sm:$0x3]
    %v1799 = vmul.f32 %v1740, %v1754
    %1801 = vset.pattern.permute.xlu0 0
    %1802 = vperm.xlu0 %1801, %v1799
    %v1803 = vpop.permute.xlu0 %1802
    %v1805 = vmul.f32 %v1803, %v1798
    %v1806 = vadd.f32 %v1797, %v1805
    %v1807 = vld [vmem:[#allocation6 + $0xa] sm:$0x3]
    %v1808 = vmul.f32 %v1743, %v1754
    %1810 = vset.pattern.permute.xlu0 0
    %1811 = vperm.xlu0 %1810, %v1808
    %v1812 = vpop.permute.xlu0 %1811
    %v1814 = vmul.f32 %v1812, %v1807
    %v1815 = vadd.f32 %v1806, %v1814
    %v1816 = vld [vmem:[#allocation6 + $0xc] sm:$0x3]
    %v1817 = vmul.f32 %v1746, %v1754
    %1819 = vset.pattern.permute.xlu0 0
    %1820 = vperm.xlu0 %1819, %v1817
    %v1821 = vpop.permute.xlu0 %1820
    %v1823 = vmul.f32 %v1821, %v1816
    %v1824 = vadd.f32 %v1815, %v1823
    %v1825 = vmul.f32 %v1821, %v276
    %v1826 = vsub.f32 1.0, %v1817
    %1828 = vset.pattern.permute.xlu0 0
    %1829 = vperm.xlu0 %1828, %v1826
    %v1830 = vpop.permute.xlu0 %1829
    %v1832 = vmul.f32 %v1830, %v1824
    %v1833 = vadd.f32 %v1825, %v1832
    %1834 = vst [vmem:[#allocation17] sm:$0x3] %v1833
    // Predicated region
    $region98: #{tpu_custom_call.1} parent=1 // pred_check
      _
    $region99: #{tpu_custom_call.1} parent=1 // pred_check_branch
      %1836 = sbr.rel (0) target = $region101
    $region100: #{tpu_custom_call.1} parent=1 // pred_region
      %s1838 = ssub.s32 32, 32
      %1839 = vsyncadd [#allocation5], %s1838
      %s1841 = sshll.u32 [#allocation17], 4
      %s1842 = int_to_ptr.vmem [resolvable:$true] %s1841
      %1844 = dma.vmem_to_hbm [thread:$0]  %s1842, 32, %s16, [#allocation5]
    $region101: #{tpu_custom_call.1} parent=1 // pred_fallthru
      _
    // Predicated region
    $region102: #{tpu_custom_call.1} parent=1 // pred_check
      _
    $region103: #{tpu_custom_call.1} parent=1 // pred_check_branch
      %1846 = sbr.rel (0) target = $region105
    $region104: #{tpu_custom_call.1} parent=1 // pred_region
      %1847 = dma.done [#allocation5], 32
    $region105: #{tpu_custom_call.1} parent=1 // pred_fallthru
      _
    %1848 = vsyncpa [#allocation4], 1
    %1849 = vsyncpa [#allocation7], 1
    %1850 = vsyncpa [#allocation10], 1
    %1851 = vsyncpa [#allocation13], 1
    %1852 = vsyncpa [#allocation16], 1
    %1853 = vsyncpa [#allocation5], 1

</llo_original>
